<compile_context>
chip_gen: v6e
topology: v6e:2x2x1
jax: 0.10.0
libtpu: 0.0.40
codegen_flags: <defaults>
</compile_context>

<pallas_src>
import math

import jax
import jax.numpy as jnp
import numpy as np
from jax.experimental import pallas as pl
from jax.experimental.pallas import tpu as pltpu

LN_EPS = 1e-5  # torch.nn.LayerNorm default


# ----------------------------- kernel helpers -----------------------------
def _silu(v):
    return v * jax.nn.sigmoid(v)


def _layernorm(v, g, b):
    # Single-pass statistics: sum and sum-of-squares are independent cross-lane
    # reductions (can overlap on the XLU), var = E[x^2] - mu^2.
    inv_w = 1.0 / v.shape[-1]
    s1 = jnp.sum(v, axis=-1, keepdims=True)
    s2 = jnp.sum(v * v, axis=-1, keepdims=True)
    mu = s1 * inv_w
    var = jnp.maximum(s2 * inv_w - mu * mu, 0.0)
    return (v - mu) * jax.lax.rsqrt(var + LN_EPS) * g + b


# --------------------------------- kernel ---------------------------------
def score_kernel(
    # per-tile data
    t_ref, xs_ref,
    # grid-resident constants
    sin_ref,                    # (2, pos_dim) f32: row0 = duplicated freqs, row1 = phase (0 | pi/2)
    tw1_ref, xw1_ref,           # encoder hidden weights, bf16: (pos_dim,64), (3D,64)
    wx_ref, wt_ref,             # folded (encoder-final @ decoder-1) weights, bf16: (64,256) each
    nw2_ref, nw3_ref,           # decoder weights, bf16: (256,256), (256,D_pad)
    v64_ref, v256_ref, nb3_ref, # packed f32 bias / LayerNorm slabs
    # output
    out_ref,
):
    f32 = jnp.float32
    bf16 = jnp.bfloat16

    # --- sinusoidal time embedding on one lane-dense vreg row:
    #     [sin(a), cos(a)] == sin(a + phase), phase = 0 / pi/2 per lane (single EUP pass)
    t = t_ref[...]                                                    # (TB, 1) f32
    temb = jnp.sin(100.0 * t * sin_ref[0:1, :] + sin_ref[1:2, :])     # (TB, pos_dim)

    # --- t_encoder hidden layer: Linear -> SiLU -> LayerNorm
    h_t = jnp.dot(temb.astype(bf16), tw1_ref[...], preferred_element_type=f32) + v64_ref[0:1, :]
    h_t = _layernorm(_silu(h_t), v64_ref[1:2, :], v64_ref[2:3, :])

    # --- x_encoder hidden layer on the pre-concatenated [x, x0, xT] slab (single K=3D matmul)
    h_x = jnp.dot(xs_ref[...].astype(bf16), xw1_ref[...], preferred_element_type=f32) + v64_ref[3:4, :]
    h_x = _layernorm(_silu(h_x), v64_ref[4:5, :], v64_ref[5:6, :])

    # --- decoder layer 1, with the encoder-final Linear layers folded in (wrapper precomputed)
    h = (jnp.dot(h_x.astype(bf16), wx_ref[...], preferred_element_type=f32)
         + jnp.dot(h_t.astype(bf16), wt_ref[...], preferred_element_type=f32)
         + v256_ref[0:1, :])
    h = _layernorm(_silu(h), v256_ref[1:2, :], v256_ref[2:3, :])

    # --- decoder layer 2
    h = jnp.dot(h.astype(bf16), nw2_ref[...], preferred_element_type=f32) + v256_ref[3:4, :]
    h = _layernorm(_silu(h), v256_ref[4:5, :], v256_ref[5:6, :])

    # --- decoder output layer: lane-dense (D padded to a multiple of 128)
    out = jnp.dot(h.astype(bf16), nw3_ref[...], preferred_element_type=f32) + nb3_ref[...]
    out_ref[...] = out.astype(out_ref.dtype)


# ----------------------------- param creation -----------------------------
def _mlp_params(key, input_dim, layer_widths):
    """MLP with Linear+SiLU+LayerNorm per hidden layer, final Linear only."""
    params = []
    prev = input_dim
    for i, w in enumerate(layer_widths):
        key, kw, kb = jax.random.split(key, 3)
        entry = {
            # stored pre-transposed: (in, out)
            "W": (jax.random.normal(kw, (prev, w), jnp.float32)
                  * (1.0 / np.sqrt(prev))).astype(jnp.float32),
            "b": jax.random.normal(kb, (1, w), jnp.float32) * 0.01,
        }
        if i < len(layer_widths) - 1:  # LayerNorm follows all but the last layer
            entry["g"] = jnp.ones((1, w), jnp.float32)
            entry["beta"] = jnp.zeros((1, w), jnp.float32)
        params.append(entry)
        prev = w
    return key, params


def init_params(key, dimension, encoder_layers=(64,), pos_dim=64,
                decoder_layers=(256, 256)):
    t_enc_dim = 2 * pos_dim
    key, t_enc = _mlp_params(key, pos_dim, list(encoder_layers) + [t_enc_dim])
    key, x_enc = _mlp_params(key, 3 * dimension, list(encoder_layers) + [t_enc_dim])
    key, net = _mlp_params(key, 2 * t_enc_dim, list(decoder_layers) + [dimension])
    return {"t_enc": t_enc, "x_enc": x_enc, "net": net}


def _round_up(a, m):
    return ((a + m - 1) // m) * m


# -------------------------------- wrapper ---------------------------------
def new_full_score_network_forward(t, x, x0, xT, params, pos_dim=64, batch_tile=1024):
    if x.ndim == 1:
        x = x[None, :]
    if x0.ndim == 1:
        x0 = x0[None, :]
    if xT.ndim == 1:
        xT = xT[None, :]
    if t.ndim == 1:
        t = t[:, None]

    N, D = x.shape
    assert pos_dim % 2 == 0 and pos_dim > 2, "pos_dim must be even and > 2"
    half = pos_dim // 2
    t_enc_dim = 2 * pos_dim

    # Sinusoidal table: duplicated frequencies + per-lane phase (0 for sin half, pi/2 for cos half).
    freq_half = np.exp(np.arange(half, dtype=np.float64) * -(math.log(10000.0) / (half - 1)))
    freq_full = np.concatenate([freq_half, freq_half])
    phase = np.concatenate([np.zeros(half), np.full(half, np.pi / 2.0)])
    sin_tab = jnp.asarray(np.stack([freq_full, phase]), dtype=jnp.float32)    # (2, pos_dim)

    t_enc, x_enc, net = params["t_enc"], params["x_enc"], params["net"]
    bf16 = jnp.bfloat16

    # Encoder hidden-layer weights (bf16 for the MXU).
    tw1 = t_enc[0]["W"].astype(bf16)                       # (pos_dim, 64)
    xw1 = x_enc[0]["W"].astype(bf16)                       # (3D, 64) -- unsplit: one K=3D matmul

    # Fold encoder-final Linear into decoder layer-1 (no nonlinearity in between).
    nw1 = net[0]["W"]                                      # (2*t_enc_dim, 256)
    nw1x, nw1t = nw1[:t_enc_dim], nw1[t_enc_dim:]
    wx = (x_enc[1]["W"] @ nw1x).astype(bf16)               # (64, 256)
    wt = (t_enc[1]["W"] @ nw1t).astype(bf16)               # (64, 256)
    b_fold = x_enc[1]["b"] @ nw1x + t_enc[1]["b"] @ nw1t + net[0]["b"]   # (1, 256) f32

    nw2 = net[1]["W"].astype(bf16)                         # (256, 256)

    # Lane-dense output: pad final weight/bias out-dim to a multiple of 128.
    D_pad = _round_up(D, 128)
    nw3p = jnp.pad(net[2]["W"], ((0, 0), (0, D_pad - D))).astype(bf16)   # (256, D_pad)
    nb3p = jnp.pad(net[2]["b"], ((0, 0), (0, D_pad - D)))                # (1, D_pad) f32

    # Pack tiny (1, w) f32 vectors into a few slabs (fewer DMA descriptors).
    v64 = jnp.concatenate([t_enc[0]["b"], t_enc[0]["g"], t_enc[0]["beta"],
                           x_enc[0]["b"], x_enc[0]["g"], x_enc[0]["beta"]], axis=0)   # (6, 64)
    v256 = jnp.concatenate([b_fold, net[0]["g"], net[0]["beta"],
                            net[1]["b"], net[1]["g"], net[1]["beta"]], axis=0)        # (6, 256)

    # One (N, 3D) input slab instead of three (N, D) streams.
    xs = jnp.concatenate([x, x0, xT], axis=-1).astype(jnp.float32)
    t = t.astype(jnp.float32)

    # Batch tile: large (per-grid-step overhead ~0.35us), but guarantee >=2 grid steps
    # whenever N allows so both v7x TensorCores get work; always a multiple of 8 sublanes.
    batch_tile = max(_round_up(batch_tile, 8), 8)
    tb = min(batch_tile, _round_up((N + 1) // 2, 8))
    tb = max(tb, 8)
    n_pad = _round_up(N, tb)
    pad = n_pad - N
    if pad:
        t = jnp.pad(t, ((0, pad), (0, 0)))
        xs = jnp.pad(xs, ((0, pad), (0, 0)))

    consts = (sin_tab, tw1, xw1, wx, wt, nw2, nw3p, v64, v256, nb3p)

    data_specs = [
        pl.BlockSpec((tb, 1), lambda i: (i, 0)),
        pl.BlockSpec((tb, 3 * D), lambda i: (i, 0)),
    ]
    const_specs = [pl.BlockSpec(c.shape, lambda i: (0, 0)) for c in consts]

    out_pad = pl.pallas_call(
        score_kernel,
        out_shape=jax.ShapeDtypeStruct((n_pad, D_pad), jnp.float32),
        grid=(n_pad // tb,),
        in_specs=data_specs + const_specs,
        out_specs=pl.BlockSpec((tb, D_pad), lambda i: (i, 0)),
        compiler_params=pltpu.CompilerParams(
            dimension_semantics=("parallel",),      # shard batch tiles across v7x's 2 TCs
            vmem_limit_bytes=32 * 1024 * 1024,      # portable: v7x 64 MiB VMEM, v5e 16 MiB default scoped
        ),
    )(t, xs, *consts)

    return out_pad[:N, :D]


# --------------------------- pure-JAX reference ----------------------------
def reference_forward(t, x, x0, xT, params, pos_dim=64):
    half = pos_dim // 2
    freq = jnp.exp(jnp.arange(half, dtype=jnp.float32) * -(math.log(10000.0) / (half - 1)))
    arg = 100.0 * t.astype(jnp.float32) * freq[None, :]
    temb = jnp.concatenate([jnp.sin(arg), jnp.cos(arg)], axis=-1)

    def mlp(h, ps):
        for p in ps[:-1]:
            h = h @ p["W"] + p["b"]
            h = h * jax.nn.sigmoid(h)
            mu = h.mean(-1, keepdims=True)
            var = ((h - mu) ** 2).mean(-1, keepdims=True)
            h = (h - mu) / jnp.sqrt(var + LN_EPS) * p["g"] + p["beta"]
        p = ps[-1]
        return h @ p["W"] + p["b"]

    temb = mlp(temb, params["t_enc"])
    xemb = mlp(jnp.concatenate([x, x0, xT], axis=-1), params["x_enc"])
    return mlp(jnp.concatenate([xemb, temb], axis=-1), params["net"])


# ---------------------------------- main -----------------------------------
if __name__ == "__main__":
    dimension = 16     # state dimension D (module output dim)
    pos_dim = 64

    key = jax.random.PRNGKey(0)
    key, kp = jax.random.split(key)
    params = init_params(kp, dimension, encoder_layers=(64,), pos_dim=pos_dim,
                         decoder_layers=(256, 256))

    # bf16 MXU path -> slightly looser tolerance than the all-f32 version.
    RTOL = ATOL = 3e-2

    # --- test 1: tiny batch (single grid step) ---
    N = 8
    key, kt, kx, k0, kT = jax.random.split(key, 5)
    t = jax.random.uniform(kt, (N, 1), jnp.float32)
    x = jax.random.normal(kx, (N, dimension), jnp.float32)
    x0 = jax.random.normal(k0, (N, dimension), jnp.float32)
    xT = jax.random.normal(kT, (N, dimension), jnp.float32)

    out = jax.block_until_ready(
        new_full_score_network_forward(t, x, x0, xT, params, pos_dim=pos_dim))
    ref = jax.block_until_ready(reference_forward(t, x, x0, xT, params, pos_dim=pos_dim))
    np.testing.assert_allclose(np.asarray(out), np.asarray(ref), rtol=RTOL, atol=ATOL)

    # --- test 2: ragged batch exercising the batch grid, >=2-tile split and padding ---
    N2 = 260
    key, kt, kx, k0, kT = jax.random.split(key, 5)
    t2 = jax.random.uniform(kt, (N2, 1), jnp.float32)
    x2 = jax.random.normal(kx, (N2, dimension), jnp.float32)
    x02 = jax.random.normal(k0, (N2, dimension), jnp.float32)
    xT2 = jax.random.normal(kT, (N2, dimension), jnp.float32)

    out2 = jax.block_until_ready(
        new_full_score_network_forward(t2, x2, x02, xT2, params, pos_dim=pos_dim))  # 2 tiles of 136
    ref2 = jax.block_until_ready(reference_forward(t2, x2, x02, xT2, params, pos_dim=pos_dim))
    np.testing.assert_allclose(np.asarray(out2), np.asarray(ref2), rtol=RTOL, atol=ATOL)

    print("KERNEL_OK")
</pallas_src>

<mosaic_0001>
module attributes {stable_mosaic.version = 11 : i64} {
  func.func @score_kernel(%arg0: i32, %arg1: memref<8x1xf32, #tpu.memory_space<vmem>>, %arg2: memref<8x48xf32, #tpu.memory_space<vmem>>, %arg3: memref<2x64xf32, #tpu.memory_space<vmem>>, %arg4: memref<64x64xbf16, #tpu.memory_space<vmem>>, %arg5: memref<48x64xbf16, #tpu.memory_space<vmem>>, %arg6: memref<64x256xbf16, #tpu.memory_space<vmem>>, %arg7: memref<64x256xbf16, #tpu.memory_space<vmem>>, %arg8: memref<256x256xbf16, #tpu.memory_space<vmem>>, %arg9: memref<256x128xbf16, #tpu.memory_space<vmem>>, %arg10: memref<6x64xf32, #tpu.memory_space<vmem>>, %arg11: memref<6x256xf32, #tpu.memory_space<vmem>>, %arg12: memref<1x128xf32, #tpu.memory_space<vmem>>, %arg13: memref<8x128xf32, #tpu.memory_space<vmem>>) attributes {dimension_semantics = [#tpu.dimension_semantics<parallel>], iteration_bounds = array<i64: 1>, scalar_prefetch = 0 : i64, scratch_operands = 0 : i64, tpu.core_type = #tpu.core_type<tc>, window_params = [{transform_indices = @transform_0, window_bounds = array<i64: 8, 1>}, {transform_indices = @transform_1, window_bounds = array<i64: 8, 48>}, {pipeline_mode = #tpu.pipeline_mode<synchronous>, transform_indices = @transform_2, window_bounds = array<i64: 2, 64>}, {pipeline_mode = #tpu.pipeline_mode<synchronous>, transform_indices = @transform_3, window_bounds = array<i64: 64, 64>}, {pipeline_mode = #tpu.pipeline_mode<synchronous>, transform_indices = @transform_4, window_bounds = array<i64: 48, 64>}, {pipeline_mode = #tpu.pipeline_mode<synchronous>, transform_indices = @transform_5, window_bounds = array<i64: 64, 256>}, {pipeline_mode = #tpu.pipeline_mode<synchronous>, transform_indices = @transform_6, window_bounds = array<i64: 64, 256>}, {pipeline_mode = #tpu.pipeline_mode<synchronous>, transform_indices = @transform_7, window_bounds = array<i64: 256, 256>}, {pipeline_mode = #tpu.pipeline_mode<synchronous>, transform_indices = @transform_8, window_bounds = array<i64: 256, 128>}, {pipeline_mode = #tpu.pipeline_mode<synchronous>, transform_indices = @transform_9, window_bounds = array<i64: 6, 64>}, {pipeline_mode = #tpu.pipeline_mode<synchronous>, transform_indices = @transform_10, window_bounds = array<i64: 6, 256>}, {pipeline_mode = #tpu.pipeline_mode<synchronous>, transform_indices = @transform_11, window_bounds = array<i64: 1, 128>}, {transform_indices = @transform_12, window_bounds = array<i64: 8, 128>}]} {
    %c0 = arith.constant 0 : index
    %c0_0 = arith.constant 0 : index
    %0 = vector.load %arg1[%c0, %c0_0] : memref<8x1xf32, #tpu.memory_space<vmem>>, vector<8x1xf32>
    %cst = arith.constant 1.000000e+02 : f32
    %1 = vector.broadcast %cst : f32 to vector<8x1xf32>
    %2 = arith.mulf %1, %0 : vector<8x1xf32>
    %c0_1 = arith.constant 0 : index
    %c0_2 = arith.constant 0 : index
    %3 = vector.load %arg3[%c0_1, %c0_2] : memref<2x64xf32, #tpu.memory_space<vmem>>, vector<1x64xf32>
    %4 = vector.broadcast %2 : vector<8x1xf32> to vector<8x64xf32>
    %5 = vector.broadcast %3 : vector<1x64xf32> to vector<8x64xf32>
    %6 = arith.mulf %4, %5 : vector<8x64xf32>
    %c1 = arith.constant 1 : index
    %c0_3 = arith.constant 0 : index
    %7 = vector.load %arg3[%c1, %c0_3] : memref<2x64xf32, #tpu.memory_space<vmem>>, vector<1x64xf32>
    %8 = vector.broadcast %7 : vector<1x64xf32> to vector<8x64xf32>
    %9 = arith.addf %6, %8 : vector<8x64xf32>
    %10 = math.sin %9 : vector<8x64xf32>
    %11 = arith.truncf %10 : vector<8x64xf32> to vector<8x64xbf16>
    %c0_4 = arith.constant 0 : index
    %c0_5 = arith.constant 0 : index
    %12 = vector.load %arg4[%c0_4, %c0_5] : memref<64x64xbf16, #tpu.memory_space<vmem>>, vector<64x64xbf16>
    %cst_6 = arith.constant dense<0.000000e+00> : vector<8x64xf32>
    %13 = tpu.matmul %11, %12, %cst_6 {dimension_numbers = #tpu.dot_dimension_numbers<[1], [0], [0], [1], [0, 0, 1, 1], [], []>} : vector<8x64xbf16>, vector<64x64xbf16>, vector<8x64xf32> -> vector<8x64xf32>
    %c0_7 = arith.constant 0 : index
    %c0_8 = arith.constant 0 : index
    %14 = vector.load %arg10[%c0_7, %c0_8] : memref<6x64xf32, #tpu.memory_space<vmem>>, vector<1x64xf32>
    %15 = vector.broadcast %14 : vector<1x64xf32> to vector<8x64xf32>
    %16 = arith.addf %13, %15 : vector<8x64xf32>
    %17 = arith.negf %16 : vector<8x64xf32>
    %18 = math.exp %17 : vector<8x64xf32>
    %cst_9 = arith.constant 1.000000e+00 : f32
    %19 = vector.broadcast %cst_9 : f32 to vector<8x64xf32>
    %20 = arith.addf %19, %18 : vector<8x64xf32>
    %21 = arith.divf %19, %20 : vector<8x64xf32>
    %22 = arith.mulf %16, %21 : vector<8x64xf32>
    %c1_10 = arith.constant 1 : index
    %c0_11 = arith.constant 0 : index
    %23 = vector.load %arg10[%c1_10, %c0_11] : memref<6x64xf32, #tpu.memory_space<vmem>>, vector<1x64xf32>
    %c2 = arith.constant 2 : index
    %c0_12 = arith.constant 0 : index
    %24 = vector.load %arg10[%c2, %c0_12] : memref<6x64xf32, #tpu.memory_space<vmem>>, vector<1x64xf32>
    %cst_13 = arith.constant dense<0.000000e+00> : vector<8xf32>
    %25 = vector.multi_reduction <add>, %22, %cst_13 [1] : vector<8x64xf32> to vector<8xf32>
    %26 = vector.shape_cast %25 : vector<8xf32> to vector<8x1xf32>
    %27 = arith.mulf %22, %22 : vector<8x64xf32>
    %cst_14 = arith.constant dense<0.000000e+00> : vector<8xf32>
    %28 = vector.multi_reduction <add>, %27, %cst_14 [1] : vector<8x64xf32> to vector<8xf32>
    %29 = vector.shape_cast %28 : vector<8xf32> to vector<8x1xf32>
    %cst_15 = arith.constant 1.562500e-02 : f32
    %30 = vector.broadcast %cst_15 : f32 to vector<8x1xf32>
    %31 = arith.mulf %26, %30 : vector<8x1xf32>
    %cst_16 = arith.constant 1.562500e-02 : f32
    %32 = vector.broadcast %cst_16 : f32 to vector<8x1xf32>
    %33 = arith.mulf %29, %32 : vector<8x1xf32>
    %34 = arith.mulf %31, %31 : vector<8x1xf32>
    %35 = arith.subf %33, %34 : vector<8x1xf32>
    %cst_17 = arith.constant 0.000000e+00 : f32
    %36 = vector.broadcast %cst_17 : f32 to vector<8x1xf32>
    %37 = arith.maximumf %35, %36 : vector<8x1xf32>
    %38 = vector.broadcast %31 : vector<8x1xf32> to vector<8x64xf32>
    %39 = arith.subf %22, %38 : vector<8x64xf32>
    %cst_18 = arith.constant 9.99999974E-6 : f32
    %40 = vector.broadcast %cst_18 : f32 to vector<8x1xf32>
    %41 = arith.addf %37, %40 : vector<8x1xf32>
    %42 = math.rsqrt %41 : vector<8x1xf32>
    %43 = vector.broadcast %42 : vector<8x1xf32> to vector<8x64xf32>
    %44 = arith.mulf %39, %43 : vector<8x64xf32>
    %45 = vector.broadcast %23 : vector<1x64xf32> to vector<8x64xf32>
    %46 = arith.mulf %44, %45 : vector<8x64xf32>
    %47 = vector.broadcast %24 : vector<1x64xf32> to vector<8x64xf32>
    %48 = arith.addf %46, %47 : vector<8x64xf32>
    %c0_19 = arith.constant 0 : index
    %c0_20 = arith.constant 0 : index
    %49 = vector.load %arg2[%c0_19, %c0_20] : memref<8x48xf32, #tpu.memory_space<vmem>>, vector<8x48xf32>
    %50 = arith.truncf %49 : vector<8x48xf32> to vector<8x48xbf16>
    %c0_21 = arith.constant 0 : index
    %c0_22 = arith.constant 0 : index
    %51 = vector.load %arg5[%c0_21, %c0_22] : memref<48x64xbf16, #tpu.memory_space<vmem>>, vector<48x64xbf16>
    %cst_23 = arith.constant dense<0.000000e+00> : vector<8x64xf32>
    %52 = tpu.matmul %50, %51, %cst_23 {dimension_numbers = #tpu.dot_dimension_numbers<[1], [0], [0], [1], [0, 0, 1, 1], [], []>} : vector<8x48xbf16>, vector<48x64xbf16>, vector<8x64xf32> -> vector<8x64xf32>
    %c3 = arith.constant 3 : index
    %c0_24 = arith.constant 0 : index
    %53 = vector.load %arg10[%c3, %c0_24] : memref<6x64xf32, #tpu.memory_space<vmem>>, vector<1x64xf32>
    %54 = vector.broadcast %53 : vector<1x64xf32> to vector<8x64xf32>
    %55 = arith.addf %52, %54 : vector<8x64xf32>
    %56 = arith.negf %55 : vector<8x64xf32>
    %57 = math.exp %56 : vector<8x64xf32>
    %cst_25 = arith.constant 1.000000e+00 : f32
    %58 = vector.broadcast %cst_25 : f32 to vector<8x64xf32>
    %59 = arith.addf %58, %57 : vector<8x64xf32>
    %60 = arith.divf %58, %59 : vector<8x64xf32>
    %61 = arith.mulf %55, %60 : vector<8x64xf32>
    %c4 = arith.constant 4 : index
    %c0_26 = arith.constant 0 : index
    %62 = vector.load %arg10[%c4, %c0_26] : memref<6x64xf32, #tpu.memory_space<vmem>>, vector<1x64xf32>
    %c5 = arith.constant 5 : index
    %c0_27 = arith.constant 0 : index
    %63 = vector.load %arg10[%c5, %c0_27] : memref<6x64xf32, #tpu.memory_space<vmem>>, vector<1x64xf32>
    %cst_28 = arith.constant dense<0.000000e+00> : vector<8xf32>
    %64 = vector.multi_reduction <add>, %61, %cst_28 [1] : vector<8x64xf32> to vector<8xf32>
    %65 = vector.shape_cast %64 : vector<8xf32> to vector<8x1xf32>
    %66 = arith.mulf %61, %61 : vector<8x64xf32>
    %cst_29 = arith.constant dense<0.000000e+00> : vector<8xf32>
    %67 = vector.multi_reduction <add>, %66, %cst_29 [1] : vector<8x64xf32> to vector<8xf32>
    %68 = vector.shape_cast %67 : vector<8xf32> to vector<8x1xf32>
    %cst_30 = arith.constant 1.562500e-02 : f32
    %69 = vector.broadcast %cst_30 : f32 to vector<8x1xf32>
    %70 = arith.mulf %65, %69 : vector<8x1xf32>
    %cst_31 = arith.constant 1.562500e-02 : f32
    %71 = vector.broadcast %cst_31 : f32 to vector<8x1xf32>
    %72 = arith.mulf %68, %71 : vector<8x1xf32>
    %73 = arith.mulf %70, %70 : vector<8x1xf32>
    %74 = arith.subf %72, %73 : vector<8x1xf32>
    %cst_32 = arith.constant 0.000000e+00 : f32
    %75 = vector.broadcast %cst_32 : f32 to vector<8x1xf32>
    %76 = arith.maximumf %74, %75 : vector<8x1xf32>
    %77 = vector.broadcast %70 : vector<8x1xf32> to vector<8x64xf32>
    %78 = arith.subf %61, %77 : vector<8x64xf32>
    %cst_33 = arith.constant 9.99999974E-6 : f32
    %79 = vector.broadcast %cst_33 : f32 to vector<8x1xf32>
    %80 = arith.addf %76, %79 : vector<8x1xf32>
    %81 = math.rsqrt %80 : vector<8x1xf32>
    %82 = vector.broadcast %81 : vector<8x1xf32> to vector<8x64xf32>
    %83 = arith.mulf %78, %82 : vector<8x64xf32>
    %84 = vector.broadcast %62 : vector<1x64xf32> to vector<8x64xf32>
    %85 = arith.mulf %83, %84 : vector<8x64xf32>
    %86 = vector.broadcast %63 : vector<1x64xf32> to vector<8x64xf32>
    %87 = arith.addf %85, %86 : vector<8x64xf32>
    %88 = arith.truncf %87 : vector<8x64xf32> to vector<8x64xbf16>
    %c0_34 = arith.constant 0 : index
    %c0_35 = arith.constant 0 : index
    %89 = vector.load %arg6[%c0_34, %c0_35] : memref<64x256xbf16, #tpu.memory_space<vmem>>, vector<64x256xbf16>
    %cst_36 = arith.constant dense<0.000000e+00> : vector<8x256xf32>
    %90 = tpu.matmul %88, %89, %cst_36 {dimension_numbers = #tpu.dot_dimension_numbers<[1], [0], [0], [1], [0, 0, 1, 1], [], []>} : vector<8x64xbf16>, vector<64x256xbf16>, vector<8x256xf32> -> vector<8x256xf32>
    %91 = arith.truncf %48 : vector<8x64xf32> to vector<8x64xbf16>
    %c0_37 = arith.constant 0 : index
    %c0_38 = arith.constant 0 : index
    %92 = vector.load %arg7[%c0_37, %c0_38] : memref<64x256xbf16, #tpu.memory_space<vmem>>, vector<64x256xbf16>
    %cst_39 = arith.constant dense<0.000000e+00> : vector<8x256xf32>
    %93 = tpu.matmul %91, %92, %cst_39 {dimension_numbers = #tpu.dot_dimension_numbers<[1], [0], [0], [1], [0, 0, 1, 1], [], []>} : vector<8x64xbf16>, vector<64x256xbf16>, vector<8x256xf32> -> vector<8x256xf32>
    %94 = arith.addf %90, %93 : vector<8x256xf32>
    %c0_40 = arith.constant 0 : index
    %c0_41 = arith.constant 0 : index
    %95 = vector.load %arg11[%c0_40, %c0_41] : memref<6x256xf32, #tpu.memory_space<vmem>>, vector<1x256xf32>
    %96 = vector.broadcast %95 : vector<1x256xf32> to vector<8x256xf32>
    %97 = arith.addf %94, %96 : vector<8x256xf32>
    %98 = arith.negf %97 : vector<8x256xf32>
    %99 = math.exp %98 : vector<8x256xf32>
    %cst_42 = arith.constant 1.000000e+00 : f32
    %100 = vector.broadcast %cst_42 : f32 to vector<8x256xf32>
    %101 = arith.addf %100, %99 : vector<8x256xf32>
    %102 = arith.divf %100, %101 : vector<8x256xf32>
    %103 = arith.mulf %97, %102 : vector<8x256xf32>
    %c1_43 = arith.constant 1 : index
    %c0_44 = arith.constant 0 : index
    %104 = vector.load %arg11[%c1_43, %c0_44] : memref<6x256xf32, #tpu.memory_space<vmem>>, vector<1x256xf32>
    %c2_45 = arith.constant 2 : index
    %c0_46 = arith.constant 0 : index
    %105 = vector.load %arg11[%c2_45, %c0_46] : memref<6x256xf32, #tpu.memory_space<vmem>>, vector<1x256xf32>
    %cst_47 = arith.constant dense<0.000000e+00> : vector<8xf32>
    %106 = vector.multi_reduction <add>, %103, %cst_47 [1] : vector<8x256xf32> to vector<8xf32>
    %107 = vector.shape_cast %106 : vector<8xf32> to vector<8x1xf32>
    %108 = arith.mulf %103, %103 : vector<8x256xf32>
    %cst_48 = arith.constant dense<0.000000e+00> : vector<8xf32>
    %109 = vector.multi_reduction <add>, %108, %cst_48 [1] : vector<8x256xf32> to vector<8xf32>
    %110 = vector.shape_cast %109 : vector<8xf32> to vector<8x1xf32>
    %cst_49 = arith.constant 3.906250e-03 : f32
    %111 = vector.broadcast %cst_49 : f32 to vector<8x1xf32>
    %112 = arith.mulf %107, %111 : vector<8x1xf32>
    %cst_50 = arith.constant 3.906250e-03 : f32
    %113 = vector.broadcast %cst_50 : f32 to vector<8x1xf32>
    %114 = arith.mulf %110, %113 : vector<8x1xf32>
    %115 = arith.mulf %112, %112 : vector<8x1xf32>
    %116 = arith.subf %114, %115 : vector<8x1xf32>
    %cst_51 = arith.constant 0.000000e+00 : f32
    %117 = vector.broadcast %cst_51 : f32 to vector<8x1xf32>
    %118 = arith.maximumf %116, %117 : vector<8x1xf32>
    %119 = vector.broadcast %112 : vector<8x1xf32> to vector<8x256xf32>
    %120 = arith.subf %103, %119 : vector<8x256xf32>
    %cst_52 = arith.constant 9.99999974E-6 : f32
    %121 = vector.broadcast %cst_52 : f32 to vector<8x1xf32>
    %122 = arith.addf %118, %121 : vector<8x1xf32>
    %123 = math.rsqrt %122 : vector<8x1xf32>
    %124 = vector.broadcast %123 : vector<8x1xf32> to vector<8x256xf32>
    %125 = arith.mulf %120, %124 : vector<8x256xf32>
    %126 = vector.broadcast %104 : vector<1x256xf32> to vector<8x256xf32>
    %127 = arith.mulf %125, %126 : vector<8x256xf32>
    %128 = vector.broadcast %105 : vector<1x256xf32> to vector<8x256xf32>
    %129 = arith.addf %127, %128 : vector<8x256xf32>
    %130 = arith.truncf %129 : vector<8x256xf32> to vector<8x256xbf16>
    %c0_53 = arith.constant 0 : index
    %c0_54 = arith.constant 0 : index
    %131 = vector.load %arg8[%c0_53, %c0_54] : memref<256x256xbf16, #tpu.memory_space<vmem>>, vector<256x256xbf16>
    %cst_55 = arith.constant dense<0.000000e+00> : vector<8x256xf32>
    %132 = tpu.matmul %130, %131, %cst_55 {dimension_numbers = #tpu.dot_dimension_numbers<[1], [0], [0], [1], [0, 0, 1, 1], [], []>} : vector<8x256xbf16>, vector<256x256xbf16>, vector<8x256xf32> -> vector<8x256xf32>
    %c3_56 = arith.constant 3 : index
    %c0_57 = arith.constant 0 : index
    %133 = vector.load %arg11[%c3_56, %c0_57] : memref<6x256xf32, #tpu.memory_space<vmem>>, vector<1x256xf32>
    %134 = vector.broadcast %133 : vector<1x256xf32> to vector<8x256xf32>
    %135 = arith.addf %132, %134 : vector<8x256xf32>
    %136 = arith.negf %135 : vector<8x256xf32>
    %137 = math.exp %136 : vector<8x256xf32>
    %cst_58 = arith.constant 1.000000e+00 : f32
    %138 = vector.broadcast %cst_58 : f32 to vector<8x256xf32>
    %139 = arith.addf %138, %137 : vector<8x256xf32>
    %140 = arith.divf %138, %139 : vector<8x256xf32>
    %141 = arith.mulf %135, %140 : vector<8x256xf32>
    %c4_59 = arith.constant 4 : index
    %c0_60 = arith.constant 0 : index
    %142 = vector.load %arg11[%c4_59, %c0_60] : memref<6x256xf32, #tpu.memory_space<vmem>>, vector<1x256xf32>
    %c5_61 = arith.constant 5 : index
    %c0_62 = arith.constant 0 : index
    %143 = vector.load %arg11[%c5_61, %c0_62] : memref<6x256xf32, #tpu.memory_space<vmem>>, vector<1x256xf32>
    %cst_63 = arith.constant dense<0.000000e+00> : vector<8xf32>
    %144 = vector.multi_reduction <add>, %141, %cst_63 [1] : vector<8x256xf32> to vector<8xf32>
    %145 = vector.shape_cast %144 : vector<8xf32> to vector<8x1xf32>
    %146 = arith.mulf %141, %141 : vector<8x256xf32>
    %cst_64 = arith.constant dense<0.000000e+00> : vector<8xf32>
    %147 = vector.multi_reduction <add>, %146, %cst_64 [1] : vector<8x256xf32> to vector<8xf32>
    %148 = vector.shape_cast %147 : vector<8xf32> to vector<8x1xf32>
    %cst_65 = arith.constant 3.906250e-03 : f32
    %149 = vector.broadcast %cst_65 : f32 to vector<8x1xf32>
    %150 = arith.mulf %145, %149 : vector<8x1xf32>
    %cst_66 = arith.constant 3.906250e-03 : f32
    %151 = vector.broadcast %cst_66 : f32 to vector<8x1xf32>
    %152 = arith.mulf %148, %151 : vector<8x1xf32>
    %153 = arith.mulf %150, %150 : vector<8x1xf32>
    %154 = arith.subf %152, %153 : vector<8x1xf32>
    %cst_67 = arith.constant 0.000000e+00 : f32
    %155 = vector.broadcast %cst_67 : f32 to vector<8x1xf32>
    %156 = arith.maximumf %154, %155 : vector<8x1xf32>
    %157 = vector.broadcast %150 : vector<8x1xf32> to vector<8x256xf32>
    %158 = arith.subf %141, %157 : vector<8x256xf32>
    %cst_68 = arith.constant 9.99999974E-6 : f32
    %159 = vector.broadcast %cst_68 : f32 to vector<8x1xf32>
    %160 = arith.addf %156, %159 : vector<8x1xf32>
    %161 = math.rsqrt %160 : vector<8x1xf32>
    %162 = vector.broadcast %161 : vector<8x1xf32> to vector<8x256xf32>
    %163 = arith.mulf %158, %162 : vector<8x256xf32>
    %164 = vector.broadcast %142 : vector<1x256xf32> to vector<8x256xf32>
    %165 = arith.mulf %163, %164 : vector<8x256xf32>
    %166 = vector.broadcast %143 : vector<1x256xf32> to vector<8x256xf32>
    %167 = arith.addf %165, %166 : vector<8x256xf32>
    %168 = arith.truncf %167 : vector<8x256xf32> to vector<8x256xbf16>
    %c0_69 = arith.constant 0 : index
    %c0_70 = arith.constant 0 : index
    %169 = vector.load %arg9[%c0_69, %c0_70] : memref<256x128xbf16, #tpu.memory_space<vmem>>, vector<256x128xbf16>
    %cst_71 = arith.constant dense<0.000000e+00> : vector<8x128xf32>
    %170 = tpu.matmul %168, %169, %cst_71 {dimension_numbers = #tpu.dot_dimension_numbers<[1], [0], [0], [1], [0, 0, 1, 1], [], []>} : vector<8x256xbf16>, vector<256x128xbf16>, vector<8x128xf32> -> vector<8x128xf32>
    %c0_72 = arith.constant 0 : index
    %c0_73 = arith.constant 0 : index
    %171 = vector.load %arg12[%c0_72, %c0_73] : memref<1x128xf32, #tpu.memory_space<vmem>>, vector<1x128xf32>
    %172 = vector.broadcast %171 : vector<1x128xf32> to vector<8x128xf32>
    %173 = arith.addf %170, %172 : vector<8x128xf32>
    %c0_74 = arith.constant 0 : index
    %c0_75 = arith.constant 0 : index
    %174 = vector.load %arg13[%c0_74, %c0_75] : memref<8x128xf32, #tpu.memory_space<vmem>>, vector<8x128xf32>
    tpu.vector_store %arg13[%c0_74, %c0_75], %173 {strides = array<i32>} : memref<8x128xf32, #tpu.memory_space<vmem>>, vector<8x128xf32>,
    return
  }
  func.func @transform_0(%arg0: i32) -> (i32, i32) {
    %c0_i32 = arith.constant 0 : i32
    %c0_i32_0 = arith.constant 0 : i32
    return %arg0, %c0_i32 : i32, i32
  }
  func.func @transform_1(%arg0: i32) -> (i32, i32) {
    %c0_i32 = arith.constant 0 : i32
    %c0_i32_0 = arith.constant 0 : i32
    return %arg0, %c0_i32 : i32, i32
  }
  func.func @transform_2(%arg0: i32) -> (i32, i32) {
    %c0_i32 = arith.constant 0 : i32
    %c0_i32_0 = arith.constant 0 : i32
    %c0_i32_1 = arith.constant 0 : i32
    return %c0_i32, %c0_i32_0 : i32, i32
  }
  func.func @transform_3(%arg0: i32) -> (i32, i32) {
    %c0_i32 = arith.constant 0 : i32
    %c0_i32_0 = arith.constant 0 : i32
    %c0_i32_1 = arith.constant 0 : i32
    return %c0_i32, %c0_i32_0 : i32, i32
  }
  func.func @transform_4(%arg0: i32) -> (i32, i32) {
    %c0_i32 = arith.constant 0 : i32
    %c0_i32_0 = arith.constant 0 : i32
    %c0_i32_1 = arith.constant 0 : i32
    return %c0_i32, %c0_i32_0 : i32, i32
  }
  func.func @transform_5(%arg0: i32) -> (i32, i32) {
    %c0_i32 = arith.constant 0 : i32
    %c0_i32_0 = arith.constant 0 : i32
    %c0_i32_1 = arith.constant 0 : i32
    return %c0_i32, %c0_i32_0 : i32, i32
  }
  func.func @transform_6(%arg0: i32) -> (i32, i32) {
    %c0_i32 = arith.constant 0 : i32
    %c0_i32_0 = arith.constant 0 : i32
    %c0_i32_1 = arith.constant 0 : i32
    return %c0_i32, %c0_i32_0 : i32, i32
  }
  func.func @transform_7(%arg0: i32) -> (i32, i32) {
    %c0_i32 = arith.constant 0 : i32
    %c0_i32_0 = arith.constant 0 : i32
    %c0_i32_1 = arith.constant 0 : i32
    return %c0_i32, %c0_i32_0 : i32, i32
  }
  func.func @transform_8(%arg0: i32) -> (i32, i32) {
    %c0_i32 = arith.constant 0 : i32
    %c0_i32_0 = arith.constant 0 : i32
    %c0_i32_1 = arith.constant 0 : i32
    return %c0_i32, %c0_i32_0 : i32, i32
  }
  func.func @transform_9(%arg0: i32) -> (i32, i32) {
    %c0_i32 = arith.constant 0 : i32
    %c0_i32_0 = arith.constant 0 : i32
    %c0_i32_1 = arith.constant 0 : i32
    return %c0_i32, %c0_i32_0 : i32, i32
  }
  func.func @transform_10(%arg0: i32) -> (i32, i32) {
    %c0_i32 = arith.constant 0 : i32
    %c0_i32_0 = arith.constant 0 : i32
    %c0_i32_1 = arith.constant 0 : i32
    return %c0_i32, %c0_i32_0 : i32, i32
  }
  func.func @transform_11(%arg0: i32) -> (i32, i32) {
    %c0_i32 = arith.constant 0 : i32
    %c0_i32_0 = arith.constant 0 : i32
    %c0_i32_1 = arith.constant 0 : i32
    return %c0_i32, %c0_i32_0 : i32, i32
  }
  func.func @transform_12(%arg0: i32) -> (i32, i32) {
    %c0_i32 = arith.constant 0 : i32
    %c0_i32_0 = arith.constant 0 : i32
    return %arg0, %c0_i32 : i32, i32
  }
}

</mosaic_0001>

<llo_original>
// kernel: tpu_custom_call.1
$region0: #{tpu_custom_call.1}
  #allocation0 [shape = 'u32[]', space=smem, size = 0x4, offset = 0x4, fixed_abs, tag = 'smem constant byte address 0x4 - core index']
  #allocation1 [shape = 'u32[144,128]{1,0:T(1,128)}', space=vmem, size = 0x12000, scoped, tag = 'internal scratch']
  %s0 = inlined_call_operand.vmem [shape: f32[8,1], index: 0, kind: input, shape index: {}]
  %s1 = inlined_call_operand.vmem [shape: f32[8,48], index: 1, kind: input, shape index: {}]
  %s2 = inlined_call_operand.vmem [shape: f32[2,64], index: 2, kind: input, shape index: {}]
  %s3 = inlined_call_operand.hbm [shape: bf16[64,64], index: 3, kind: input, shape index: {}]
  %s4 = inlined_call_operand.hbm [shape: bf16[48,64], index: 4, kind: input, shape index: {}]
  %s5 = inlined_call_operand.hbm [shape: bf16[64,256], index: 5, kind: input, shape index: {}]
  %s6 = inlined_call_operand.hbm [shape: bf16[64,256], index: 6, kind: input, shape index: {}]
  %s7 = inlined_call_operand.hbm [shape: bf16[256,256], index: 7, kind: input, shape index: {}]
  %s8 = inlined_call_operand.hbm [shape: bf16[256,128], index: 8, kind: input, shape index: {}]
  %s9 = inlined_call_operand.hbm [shape: f32[6,64], index: 9, kind: input, shape index: {}]
  %s10 = inlined_call_operand.vmem [shape: f32[6,256], index: 10, kind: input, shape index: {}]
  %s11 = inlined_call_operand.vmem [shape: f32[1,128], index: 11, kind: input, shape index: {}]
  %s12 = inlined_call_operand.hbm [shape: f32[8,128], index: 12, kind: output, shape index: {}]
  %s13 = sld [smem:[#allocation0]]
  $region86: #{tpu_custom_call.1} parent=0
    _
  %s15 = ssub.s32 1, %s13
  %s16 = scalar_select 0, %s15, %s13
  $region1: #{tpu_custom_call.1} parent=0
    #allocation2 [shape = 'u8[16384]{0}', space=vmem, size = 0x4000, scoped, tag = 'input window, operand 3, single buffered']
    #allocation3 [shape = 's32[1]{0}', space=sflag, size = 0x4, scoped, tag = 'scoped memory for tpu_custom_call.1']
    #allocation4 [shape = 's32[1]{0}', space=sflag, size = 0x4, scoped, tag = 'scoped memory for tpu_custom_call.1']
    #allocation5 [shape = 'u8[12288]{0}', space=vmem, size = 0x3000, scoped, tag = 'input window, operand 4, single buffered']
    #allocation6 [shape = 's32[1]{0}', space=sflag, size = 0x4, scoped, tag = 'scoped memory for tpu_custom_call.1']
    #allocation7 [shape = 'u8[32768]{0}', space=vmem, size = 0x8000, scoped, tag = 'input window, operand 5, single buffered']
    #allocation8 [shape = 'u8[32768]{0}', space=vmem, size = 0x8000, scoped, tag = 'input window, operand 6, single buffered']
    #allocation9 [shape = 's32[1]{0}', space=sflag, size = 0x4, scoped, tag = 'scoped memory for tpu_custom_call.1']
    #allocation10 [shape = 'u8[131072]{0}', space=vmem, size = 0x20000, scoped, tag = 'input window, operand 7, single buffered']
    #allocation11 [shape = 'u8[65536]{0}', space=vmem, size = 0x10000, scoped, tag = 'input window, operand 8, single buffered']
    #allocation12 [shape = 's32[1]{0}', space=sflag, size = 0x4, scoped, tag = 'scoped memory for tpu_custom_call.1']
    #allocation13 [shape = 'u8[4096]{0}', space=vmem, size = 0x1000, scoped, tag = 'input window, operand 9, single buffered']
    #allocation14 [shape = 'u8[4096]{0}', space=vmem, size = 0x1000, scoped, tag = 'output window, operand 0, single buffered']
    %17 = vsyncpa [#allocation3], 0
    %18 = vsyncpa [#allocation6], 0
    %19 = vsyncpa [#allocation9], 0
    %20 = vsyncpa [#allocation12], 0
    %21 = vsyncpa [#allocation4], 0
    // Predicated region
    $region2: #{tpu_custom_call.1} parent=1 // pred_check
      _
    $region3: #{tpu_custom_call.1} parent=1 // pred_check_branch
      %23 = sbr.rel (0) target = $region5
    $region4: #{tpu_custom_call.1} parent=1 // pred_region
      _
    $region5: #{tpu_custom_call.1} parent=1 // pred_fallthru
      _
    // Predicated region
    $region6: #{tpu_custom_call.1} parent=1 // pred_check
      _
    $region7: #{tpu_custom_call.1} parent=1 // pred_check_branch
      %25 = sbr.rel (0) target = $region9
    $region8: #{tpu_custom_call.1} parent=1 // pred_region
      _
    $region9: #{tpu_custom_call.1} parent=1 // pred_fallthru
      _
    // Predicated region
    $region10: #{tpu_custom_call.1} parent=1 // pred_check
      _
    $region11: #{tpu_custom_call.1} parent=1 // pred_check_branch
      %27 = sbr.rel (0) target = $region13
    $region12: #{tpu_custom_call.1} parent=1 // pred_region
      _
    $region13: #{tpu_custom_call.1} parent=1 // pred_fallthru
      _
    // Predicated region
    $region14: #{tpu_custom_call.1} parent=1 // pred_check
      _
    $region15: #{tpu_custom_call.1} parent=1 // pred_check_branch
      %29 = sbr.rel (0) target = $region17
    $region16: #{tpu_custom_call.1} parent=1 // pred_region
      %s31 = ssub.s32 512, 512
      %32 = vsyncadd [#allocation3], %s31
      %s33 = sshll.u32 [#allocation2], 4
      %s34 = int_to_ptr.vmem [resolvable:$true] %s33
      %39 = dma.hbm_to_vmem [thread:$0]  %s3, 512, %s34, [#allocation3], 64, 64, 4
    $region17: #{tpu_custom_call.1} parent=1 // pred_fallthru
      _
    // Predicated region
    $region18: #{tpu_custom_call.1} parent=1 // pred_check
      _
    $region19: #{tpu_custom_call.1} parent=1 // pred_check_branch
      %41 = sbr.rel (0) target = $region21
    $region20: #{tpu_custom_call.1} parent=1 // pred_region
      %s43 = ssub.s32 384, 384
      %44 = vsyncadd [#allocation6], %s43
      %s45 = sshll.u32 [#allocation5], 4
      %s46 = int_to_ptr.vmem [resolvable:$true] %s45
      %51 = dma.hbm_to_vmem [thread:$0]  %s4, 384, %s46, [#allocation6], 64, 64, 4
    $region21: #{tpu_custom_call.1} parent=1 // pred_fallthru
      _
    // Predicated region
    $region22: #{tpu_custom_call.1} parent=1 // pred_check
      _
    $region23: #{tpu_custom_call.1} parent=1 // pred_check_branch
      %53 = sbr.rel (0) target = $region25
    $region24: #{tpu_custom_call.1} parent=1 // pred_region
      %s55 = ssub.s32 1024, 1024
      %56 = vsyncadd [#allocation6], %s55
      %s57 = sshll.u32 [#allocation7], 4
      %s58 = int_to_ptr.vmem [resolvable:$true] %s57
      %63 = dma.hbm_to_vmem [thread:$0]  %s5, 1024, %s58, [#allocation6], 128, 128, 8
    $region25: #{tpu_custom_call.1} parent=1 // pred_fallthru
      _
    // Predicated region
    $region26: #{tpu_custom_call.1} parent=1 // pred_check
      _
    $region27: #{tpu_custom_call.1} parent=1 // pred_check_branch
      %65 = sbr.rel (0) target = $region29
    $region28: #{tpu_custom_call.1} parent=1 // pred_region
      %s67 = ssub.s32 1024, 1024
      %68 = vsyncadd [#allocation9], %s67
      %s69 = sshll.u32 [#allocation8], 4
      %s70 = int_to_ptr.vmem [resolvable:$true] %s69
      %75 = dma.hbm_to_vmem [thread:$0]  %s6, 1024, %s70, [#allocation9], 128, 128, 8
    $region29: #{tpu_custom_call.1} parent=1 // pred_fallthru
      _
    // Predicated region
    $region30: #{tpu_custom_call.1} parent=1 // pred_check
      _
    $region31: #{tpu_custom_call.1} parent=1 // pred_check_branch
      %77 = sbr.rel (0) target = $region33
    $region32: #{tpu_custom_call.1} parent=1 // pred_region
      %s79 = ssub.s32 4096, 4096
      %80 = vsyncadd [#allocation9], %s79
      %s81 = sshll.u32 [#allocation10], 4
      %s82 = int_to_ptr.vmem [resolvable:$true] %s81
      %87 = dma.hbm_to_vmem [thread:$0]  %s7, 4096, %s82, [#allocation9], 128, 128, 8
    $region33: #{tpu_custom_call.1} parent=1 // pred_fallthru
      _
    // Predicated region
    $region34: #{tpu_custom_call.1} parent=1 // pred_check
      _
    $region35: #{tpu_custom_call.1} parent=1 // pred_check_branch
      %89 = sbr.rel (0) target = $region37
    $region36: #{tpu_custom_call.1} parent=1 // pred_region
      %s91 = ssub.s32 2048, 2048
      %92 = vsyncadd [#allocation12], %s91
      %s93 = sshll.u32 [#allocation11], 4
      %s94 = int_to_ptr.vmem [resolvable:$true] %s93
      %99 = dma.hbm_to_vmem [thread:$0]  %s8, 2048, %s94, [#allocation12], 64, 64, 4
    $region37: #{tpu_custom_call.1} parent=1 // pred_fallthru
      _
    // Predicated region
    $region38: #{tpu_custom_call.1} parent=1 // pred_check
      _
    $region39: #{tpu_custom_call.1} parent=1 // pred_check_branch
      %101 = sbr.rel (0) target = $region41
    $region40: #{tpu_custom_call.1} parent=1 // pred_region
      %s103 = ssub.s32 128, 128
      %104 = vsyncadd [#allocation12], %s103
      %s106 = sshll.u32 [#allocation13], 4
      %s107 = int_to_ptr.vmem [resolvable:$true] %s106
      %109 = dma.hbm_to_vmem [thread:$0]  %s9, 128, %s107, [#allocation12]
    $region41: #{tpu_custom_call.1} parent=1 // pred_fallthru
      _
    // Predicated region
    $region42: #{tpu_custom_call.1} parent=1 // pred_check
      _
    $region43: #{tpu_custom_call.1} parent=1 // pred_check_branch
      %111 = sbr.rel (0) target = $region45
    $region44: #{tpu_custom_call.1} parent=1 // pred_region
      _
    $region45: #{tpu_custom_call.1} parent=1 // pred_fallthru
      _
    // Predicated region
    $region46: #{tpu_custom_call.1} parent=1 // pred_check
      _
    $region47: #{tpu_custom_call.1} parent=1 // pred_check_branch
      %113 = sbr.rel (0) target = $region49
    $region48: #{tpu_custom_call.1} parent=1 // pred_region
      _
    $region49: #{tpu_custom_call.1} parent=1 // pred_fallthru
      _
    // Predicated region
    $region50: #{tpu_custom_call.1} parent=1 // pred_check
      _
    $region51: #{tpu_custom_call.1} parent=1 // pred_check_branch
      %115 = sbr.rel (0) target = $region53
    $region52: #{tpu_custom_call.1} parent=1 // pred_region
      %116 = dma.done [#allocation3], 512
    $region53: #{tpu_custom_call.1} parent=1 // pred_fallthru
      _
    // Predicated region
    $region54: #{tpu_custom_call.1} parent=1 // pred_check
      _
    $region55: #{tpu_custom_call.1} parent=1 // pred_check_branch
      %118 = sbr.rel (0) target = $region57
    $region56: #{tpu_custom_call.1} parent=1 // pred_region
      %119 = dma.done [#allocation6], 384
    $region57: #{tpu_custom_call.1} parent=1 // pred_fallthru
      _
    // Predicated region
    $region58: #{tpu_custom_call.1} parent=1 // pred_check
      _
    $region59: #{tpu_custom_call.1} parent=1 // pred_check_branch
      %121 = sbr.rel (0) target = $region61
    $region60: #{tpu_custom_call.1} parent=1 // pred_region
      %122 = dma.done [#allocation6], 1024
    $region61: #{tpu_custom_call.1} parent=1 // pred_fallthru
      _
    // Predicated region
    $region62: #{tpu_custom_call.1} parent=1 // pred_check
      _
    $region63: #{tpu_custom_call.1} parent=1 // pred_check_branch
      %124 = sbr.rel (0) target = $region65
    $region64: #{tpu_custom_call.1} parent=1 // pred_region
      %125 = dma.done [#allocation9], 1024
    $region65: #{tpu_custom_call.1} parent=1 // pred_fallthru
      _
    // Predicated region
    $region66: #{tpu_custom_call.1} parent=1 // pred_check
      _
    $region67: #{tpu_custom_call.1} parent=1 // pred_check_branch
      %127 = sbr.rel (0) target = $region69
    $region68: #{tpu_custom_call.1} parent=1 // pred_region
      %128 = dma.done [#allocation9], 4096
    $region69: #{tpu_custom_call.1} parent=1 // pred_fallthru
      _
    // Predicated region
    $region70: #{tpu_custom_call.1} parent=1 // pred_check
      _
    $region71: #{tpu_custom_call.1} parent=1 // pred_check_branch
      %130 = sbr.rel (0) target = $region73
    $region72: #{tpu_custom_call.1} parent=1 // pred_region
      %131 = dma.done [#allocation12], 2048
    $region73: #{tpu_custom_call.1} parent=1 // pred_fallthru
      _
    // Predicated region
    $region74: #{tpu_custom_call.1} parent=1 // pred_check
      _
    $region75: #{tpu_custom_call.1} parent=1 // pred_check_branch
      %133 = sbr.rel (0) target = $region77
    $region76: #{tpu_custom_call.1} parent=1 // pred_region
      %134 = dma.done [#allocation12], 128
    $region77: #{tpu_custom_call.1} parent=1 // pred_fallthru
      _
    %v136 = vld [vmem:[%s0] sm:$0xff]
    %v137 = vmul.f32 %v136, 100.0
    %v138 = vld [vmem:[%s2] sm:$0x1]
    %140 = vset.pattern.permute.xlu0 0
    %141 = vperm.xlu0 %140, %v137
    %v142 = vpop.permute.xlu0 %141
    %v144 = vlaneseq
    %v145 = vshrl.u32 %v144, 7
    %v146 = vsub.s32 0, %v145
    %v147 = vrot.slane %v138, %v146
    %v148 = vmul.f32 %v142, %v147
    %v149 = vld [vmem:[%s2 + $0x1] sm:$0x1]
    %v150 = vlaneseq
    %v151 = vshrl.u32 %v150, 7
    %v152 = vsub.s32 0, %v151
    %v153 = vrot.slane %v149, %v152
    %v154 = vadd.f32 %v148, %v153
    %v155 = vand.u32 2147483647, %v154
    %vm156 = vcmp.le.f32.partialorder %v155, 0.7853982
    %vm157 = vcmp.lt.s32.totalorder %v154, 0
    %v158 = vand.u32 %v154, 2139095040
    %v159 = vshrl.u32 %v158, 23
    %v160 = vsub.s32 %v159, 127
    %v161 = vand.u32 2147483647, %v154
    %v162 = vand.u32 %v161, 8388607
    %v163 = vor.u32 %v162, 8388608
    %v164 = vsub.s32 0, %v163
    %v165 = vadd.s32 %v160, 1
    %vm166 = vcmp.gt.s32.totalorder %v165, 0
    %v167 = vsel %vm166, %v165, 0
    %v168 = vshrl.u32 %v167, 5
    %v169 = vand.u32 %v167, 31
    %v170 = vsub.s32 32, %v169
    %v171 = vshrl.u32 683565275, %v170
    %v172 = vshll.u32 683565275, %v169
    %v173 = vshrl.u32 2475754826, %v170
    %v174 = vor.u32 %v172, %v173
    %v175 = vshll.u32 2475754826, %v169
    %v176 = vshrl.u32 2131351028, %v170
    %v177 = vor.u32 %v175, %v176
    %v178 = vshll.u32 2131351028, %v169
    %v179 = vshrl.u32 2102212464, %v170
    %v180 = vor.u32 %v178, %v179
    %v181 = vshll.u32 2102212464, %v169
    %v182 = vshrl.u32 920167782, %v170
    %v183 = vor.u32 %v181, %v182
    %v184 = vshll.u32 920167782, %v169
    %v185 = vshrl.u32 1326507024, %v170
    %v186 = vor.u32 %v184, %v185
    %vm187 = vcmp.lt.s32.totalorder %v168, 1
    %vm188 = vcmp.lt.s32.totalorder %v168, 2
    %vm189 = vcmp.lt.s32.totalorder %v168, 3
    %vm190 = vcmp.lt.s32.totalorder %v168, 4
    %v191 = vsel %vm187, %v171, %v174
    %v192 = vsel %vm190, %v180, 2102212464
    %v193 = vsel %vm189, %v177, %v192
    %v194 = vsel %vm188, %v191, %v193
    %v195 = vsel %vm187, %v174, %v177
    %v196 = vsel %vm190, %v183, 920167782
    %v197 = vsel %vm189, %v180, %v196
    %v198 = vsel %vm188, %v195, %v197
    %v199 = vsel %vm187, %v177, %v180
    %v200 = vsel %vm190, %v186, 1326507024
    %v201 = vsel %vm189, %v183, %v200
    %v202 = vsel %vm188, %v199, %v201
    %v203 = vshll.u32 %v163, 8
    %v204 = vmul.u32.u64.compose %v203, %v202
    %v205 = vextract.low.u32 %v204
    %v206 = vextract.high.u32 %v204
    %v207 = vmul.u32.u64.compose %v203, %v198
    %v208 = vextract.low.u32 %v207
    %v209 = vextract.high.u32 %v207
    %v210 = vmul.u32 %v203, %v194
    %v211 = vadd.s32 %v206, %v208
    %vm212 = vc.u32 %v206, %v208
    %v213 = vadd.s32 %v209, 1
    %v214 = vsel %vm212, %v213, %v209
    %v215 = vadd.s32 %v210, %v214
    %v216 = vadd.s32 %v215, 536870912
    %v217 = vshrl.u32 %v216, 30
    %v218 = vshll.u32 %v217, 30
    %v219 = vsub.s32 %v215, %v218
    %vm220 = vcmp.lt.s32.totalorder %v219, 0
    %v221 = vsub.s32 0, %v219
    %v222 = vsel %vm220, %v221, %v219
    %v223 = vclz %v222
    %v224 = vsub.s32 %v223, 2
    %vm225 = vcmp.gt.s32.totalorder 0, %v224
    %v226 = vsel %vm225, 0, %v224
    %v227 = vsub.s32 32, %v226
    %v228 = vshll.u32 %v219, %v226
    %v229 = vshrl.u32 %v211, %v227
    %v230 = vor.u32 %v228, %v229
    %v231 = vsub.s32 4294967266, %v226
    %v232 = vadd.s32 %v231, 127
    %v233 = vshll.u32 %v232, 23
    %v234 = vor.u32 4788187, %v233
    %v235 = vand.u32 2147483647, %v234
    %v237 = vcvt.s32.f32 %v230
    %v238 = vmul.f32 %v237, %v235
    %v239 = vxor.u32 %v238, 2147483648
    %v240 = vsel %vm157, %v239, %v238
    %v241 = vsub.s32 4, %v217
    %v242 = vsel %vm157, %v241, %v217
    %v243 = vsel %vm156, %v154, %v240
    %v244 = vsel %vm156, 0, %v242
    %v245 = vcosq.f32.pop %v243
    %v246 = vsinq.f32.pop %v243
    %vm247 = vweird.f32 %v154
    %v248 = vadd.s32 %v244, 3
    %v249 = vand.u32 %v248, 3
    %vm250 = vcmp.lt.s32.totalorder %v249, 2
    %vm251 = vcmp.eq.s32.totalorder %v249, 0
    %v252 = vxor.u32 %v246, 2147483648
    %v253 = vsel %vm251, %v245, %v252
    %vm254 = vcmp.eq.s32.totalorder %v249, 2
    %v255 = vxor.u32 %v245, 2147483648
    %v256 = vsel %vm254, %v255, %v246
    %v257 = vsel %vm250, %v253, %v256
    %v258 = vsel %vm247, nan, %v257
    %v259 = vpack.c.bf16 %v258, %v258
    %v260 = vld [vmem:[#allocation2] sm:$0xf]
    %v261 = vld [vmem:[#allocation2 + $0x4] sm:$0xf]
    %v262 = vld [vmem:[#allocation2 + $0x8] sm:$0xf]
    %v263 = vld [vmem:[#allocation2 + $0xc] sm:$0xf]
    %v264 = vld [vmem:[#allocation2 + $0x10] sm:$0xf]
    %v265 = vld [vmem:[#allocation2 + $0x14] sm:$0xf]
    %v266 = vld [vmem:[#allocation2 + $0x18] sm:$0xf]
    %v267 = vld [vmem:[#allocation2 + $0x1c] sm:$0xf]
    %v268 = vld [vmem:[#allocation13] sm:$0x1]
    %v269 = vlaneseq
    %v270 = vshrl.u32 %v269, 7
    %v271 = vsub.s32 0, %v270
    %v272 = vrot.slane %v268, %v271
    %v281 = vunpack.c.l.b16 %v260
    %v282 = vunpack.c.l.b16 %v261
    %v283 = vunpack.c.l.b16 %v262
    %v284 = vunpack.c.l.b16 %v263
    %v285 = vunpack.c.l.b16 %v264
    %v286 = vunpack.c.l.b16 %v265
    %v287 = vunpack.c.l.b16 %v266
    %v288 = vunpack.c.l.b16 %v267
    %v289 = vpack.c.b16 %v282, %v281
    %v290 = vpack.c.b16 %v284, %v283
    %v291 = vpack.c.b16 %v286, %v285
    %v292 = vpack.c.b16 %v288, %v287
    %vm297 = vcmask 523264
    %v299 = vsel %vm297, %v259, 0
    %301 = vmatprep.subr.bf16.mxu0 0
    %302 = vmatpush1.bf16.msra.mxu0 0
    %303 = vmatprep.subr.bf16.mxu0 0
    %304 = vmatpush1.bf16.msra.mxu0 0
    %305 = vmatprep.subr.bf16.mxu0 0
    %306 = vmatpush1.bf16.msra.mxu0 0
    %307 = vmatprep.subr.bf16.mxu0 0
    %308 = vmatpush1.bf16.msra.mxu0 0
    %309 = vmatprep.subr.bf16.mxu0 0
    %310 = vmatpush1.bf16.msra.mxu0 %v292
    %311 = vmatprep.subr.bf16.mxu0 0
    %312 = vmatpush1.bf16.msra.mxu0 %v291
    %313 = vmatprep.subr.bf16.mxu0 0
    %314 = vmatpush1.bf16.msra.mxu0 %v290
    %315 = vmatprep.subr.bf16.mxu0 0
    %316 = vmatpush1.bf16.msra.mxu0 %v289
    %317 = vmatprep.subr.bf16.mxu0 0
    %318 = vmatpush2.bf16.msra.mxu0 0
    %319 = vmatprep.subr.bf16.mxu0 0
    %320 = vmatpush2.bf16.msra.mxu0 0
    %321 = vmatprep.subr.bf16.mxu0 0
    %322 = vmatpush2.bf16.msra.mxu0 0
    %323 = vmatprep.subr.bf16.mxu0 0
    %324 = vmatpush2.bf16.msra.mxu0 0
    %325 = vmatprep.subr.bf16.mxu0 0
    %326 = vmatpush2.bf16.msra.mxu0 0
    %327 = vmatprep.subr.bf16.mxu0 0
    %328 = vmatpush2.bf16.msra.mxu0 0
    %329 = vmatprep.subr.bf16.mxu0 0
    %330 = vmatpush2.bf16.msra.mxu0 0
    %331 = vmatprep.subr.bf16.mxu0 0
    %332 = vmatpush2.bf16.msra.mxu0 0
    %333 = vmatprep.mubr.bf16.mxu0 0
    %334 = vmatmul.mubr.bf16.gmra.mxu0 %v299
    %v335 = vpop.f32.mrf.mxu0
    %v336 = vadd.f32 %v272, %v335
    %v337 = vpop.f32.mrf.mxu0
    %v338 = vpop.f32.mrf.mxu0
    %v339 = vpop.f32.mrf.mxu0
    %340 = vdwg.mxu0
    %v341 = vxor.u32 %v336, 2147483648
    %v342 = vmul.f32 %v341, 1.442695
    %v343 = vpow.pop %v342
    %v344 = vadd.f32 %v343, 1.0
    %v345 = vrcp.pop %v344
    %v346 = vmul.f32 1.0, %v345
    %v347 = vmul.f32 %v336, %v346
    %v348 = vld [vmem:[#allocation13 + $0x1] sm:$0x1]
    %v349 = vld [vmem:[#allocation13 + $0x2] sm:$0x1]
    %v350 = vsel %vm297, %v347, 0.0
    %351 = vadd.xlane.f32.xlu0 %v350
    %v352 = vpop.xlane.xlu0 %351
    %v353 = vmul.f32 %v347, %v347
    %v354 = vsel %vm297, %v353, 0.0
    %355 = vadd.xlane.f32.xlu0 %v354
    %v356 = vpop.xlane.xlu0 %355
    %v357 = vmul.f32 %v352, 0.015625
    %v358 = vmul.f32 %v356, 0.015625
    %v359 = vmul.f32 %v357, %v357
    %v360 = vsub.f32 %v358, %v359
    %v361 = vmax.f32 %v360, 0.0
    %v362 = vsub.f32 %v347, %v357
    %v363 = vadd.f32 %v361, 1e-05
    %v364 = vrsqrt.pop %v363
    %v365 = vmul.f32 %v362, %v364
    %v366 = vlaneseq
    %v367 = vshrl.u32 %v366, 7
    %v368 = vsub.s32 0, %v367
    %v369 = vrot.slane %v348, %v368
    %v370 = vmul.f32 %v365, %v369
    %v371 = vlaneseq
    %v372 = vshrl.u32 %v371, 7
    %v373 = vsub.s32 0, %v372
    %v374 = vrot.slane %v349, %v373
    %v375 = vadd.f32 %v370, %v374
    %v376 = vld [vmem:[%s1] sm:$0xff]
    %v377 = vpack.c.bf16 %v376, %v376
    %v378 = vld [vmem:[#allocation5] sm:$0xf]
    %v379 = vld [vmem:[#allocation5 + $0x4] sm:$0xf]
    %v380 = vld [vmem:[#allocation5 + $0x8] sm:$0xf]
    %v381 = vld [vmem:[#allocation5 + $0xc] sm:$0xf]
    %v382 = vld [vmem:[#allocation5 + $0x10] sm:$0xf]
    %v383 = vld [vmem:[#allocation5 + $0x14] sm:$0xf]
    %v384 = vld [vmem:[#allocation13 + $0x3] sm:$0x1]
    %v385 = vlaneseq
    %v386 = vshrl.u32 %v385, 7
    %v387 = vsub.s32 0, %v386
    %v388 = vrot.slane %v384, %v387
    %v395 = vunpack.c.l.b16 %v378
    %v396 = vunpack.c.l.b16 %v379
    %v397 = vunpack.c.l.b16 %v380
    %v398 = vunpack.c.l.b16 %v381
    %v399 = vunpack.c.l.b16 %v382
    %v400 = vunpack.c.l.b16 %v383
    %v401 = vpack.c.b16 %v396, %v395
    %v402 = vpack.c.b16 %v398, %v397
    %v403 = vpack.c.b16 %v400, %v399
    %vm407 = vcmask 392192
    %v409 = vsel %vm407, %v377, 0
    %411 = vmatprep.subr.bf16.mxu0 0
    %412 = vmatpush1.bf16.msra.mxu0 0
    %413 = vmatprep.subr.bf16.mxu0 0
    %414 = vmatpush1.bf16.msra.mxu0 0
    %415 = vmatprep.subr.bf16.mxu0 0
    %416 = vmatpush1.bf16.msra.mxu0 0
    %417 = vmatprep.subr.bf16.mxu0 0
    %418 = vmatpush1.bf16.msra.mxu0 0
    %419 = vmatprep.subr.bf16.mxu0 0
    %420 = vmatpush1.bf16.msra.mxu0 0
    %421 = vmatprep.subr.bf16.mxu0 0
    %422 = vmatpush1.bf16.msra.mxu0 %v403
    %423 = vmatprep.subr.bf16.mxu0 0
    %424 = vmatpush1.bf16.msra.mxu0 %v402
    %425 = vmatprep.subr.bf16.mxu0 0
    %426 = vmatpush1.bf16.msra.mxu0 %v401
    %427 = vmatprep.subr.bf16.mxu0 0
    %428 = vmatpush2.bf16.msra.mxu0 0
    %429 = vmatprep.subr.bf16.mxu0 0
    %430 = vmatpush2.bf16.msra.mxu0 0
    %431 = vmatprep.subr.bf16.mxu0 0
    %432 = vmatpush2.bf16.msra.mxu0 0
    %433 = vmatprep.subr.bf16.mxu0 0
    %434 = vmatpush2.bf16.msra.mxu0 0
    %435 = vmatprep.subr.bf16.mxu0 0
    %436 = vmatpush2.bf16.msra.mxu0 0
    %437 = vmatprep.subr.bf16.mxu0 0
    %438 = vmatpush2.bf16.msra.mxu0 0
    %439 = vmatprep.subr.bf16.mxu0 0
    %440 = vmatpush2.bf16.msra.mxu0 0
    %441 = vmatprep.subr.bf16.mxu0 0
    %442 = vmatpush2.bf16.msra.mxu0 0
    %443 = vmatprep.mubr.bf16.mxu0 0
    %444 = vmatmul.mubr.bf16.gmra.mxu0 %v409
    %v445 = vpop.f32.mrf.mxu0
    %v446 = vadd.f32 %v388, %v445
    %v447 = vpop.f32.mrf.mxu0
    %v448 = vpop.f32.mrf.mxu0
    %v449 = vpop.f32.mrf.mxu0
    %450 = vdwg.mxu0
    %v451 = vxor.u32 %v446, 2147483648
    %v452 = vmul.f32 %v451, 1.442695
    %v453 = vpow.pop %v452
    %v454 = vadd.f32 %v453, 1.0
    %v455 = vrcp.pop %v454
    %v456 = vmul.f32 1.0, %v455
    %v457 = vmul.f32 %v446, %v456
    %v458 = vld [vmem:[#allocation13 + $0x4] sm:$0x1]
    %v459 = vld [vmem:[#allocation13 + $0x5] sm:$0x1]
    %v460 = vsel %vm297, %v457, 0.0
    %461 = vadd.xlane.f32.xlu0 %v460
    %v462 = vpop.xlane.xlu0 %461
    %v463 = vmul.f32 %v457, %v457
    %v464 = vsel %vm297, %v463, 0.0
    %465 = vadd.xlane.f32.xlu0 %v464
    %v466 = vpop.xlane.xlu0 %465
    %v467 = vmul.f32 %v462, 0.015625
    %v468 = vmul.f32 %v466, 0.015625
    %v469 = vmul.f32 %v467, %v467
    %v470 = vsub.f32 %v468, %v469
    %v471 = vmax.f32 %v470, 0.0
    %v472 = vsub.f32 %v457, %v467
    %v473 = vadd.f32 %v471, 1e-05
    %v474 = vrsqrt.pop %v473
    %v475 = vmul.f32 %v472, %v474
    %v476 = vlaneseq
    %v477 = vshrl.u32 %v476, 7
    %v478 = vsub.s32 0, %v477
    %v479 = vrot.slane %v458, %v478
    %v480 = vmul.f32 %v475, %v479
    %v481 = vlaneseq
    %v482 = vshrl.u32 %v481, 7
    %v483 = vsub.s32 0, %v482
    %v484 = vrot.slane %v459, %v483
    %v485 = vadd.f32 %v480, %v484
    %v486 = vpack.c.bf16 %v485, %v485
    %v487 = vld [vmem:[#allocation7] sm:$0xff]
    %v488 = vld [vmem:[#allocation7 + $0x8] sm:$0xff]
    %v489 = vld [vmem:[#allocation7 + $0x10] sm:$0xff]
    %v490 = vld [vmem:[#allocation7 + $0x18] sm:$0xff]
    %v491 = vld [vmem:[#allocation7 + $0x20] sm:$0xff]
    %v492 = vld [vmem:[#allocation7 + $0x28] sm:$0xff]
    %v493 = vld [vmem:[#allocation7 + $0x30] sm:$0xff]
    %v494 = vld [vmem:[#allocation7 + $0x38] sm:$0xff]
    %v495 = vpack.c.bf16 %v375, %v375
    %v496 = vld [vmem:[#allocation8] sm:$0xff]
    %v497 = vld [vmem:[#allocation8 + $0x8] sm:$0xff]
    %v498 = vld [vmem:[#allocation8 + $0x10] sm:$0xff]
    %v499 = vld [vmem:[#allocation8 + $0x18] sm:$0xff]
    %v500 = vld [vmem:[#allocation8 + $0x20] sm:$0xff]
    %v501 = vld [vmem:[#allocation8 + $0x28] sm:$0xff]
    %v502 = vld [vmem:[#allocation8 + $0x30] sm:$0xff]
    %v503 = vld [vmem:[#allocation8 + $0x38] sm:$0xff]
    %v512 = vunpack.c.l.b16 %v496
    %v513 = vunpack.c.h.b16 %v496
    %v514 = vunpack.c.l.b16 %v497
    %v515 = vunpack.c.h.b16 %v497
    %v516 = vunpack.c.l.b16 %v498
    %v517 = vunpack.c.h.b16 %v498
    %v518 = vunpack.c.l.b16 %v499
    %v519 = vunpack.c.h.b16 %v499
    %v520 = vunpack.c.l.b16 %v500
    %v521 = vunpack.c.h.b16 %v500
    %v522 = vunpack.c.l.b16 %v501
    %v523 = vunpack.c.h.b16 %v501
    %v524 = vunpack.c.l.b16 %v502
    %v525 = vunpack.c.h.b16 %v502
    %v526 = vunpack.c.l.b16 %v503
    %v527 = vunpack.c.h.b16 %v503
    %v528 = vpack.c.b16 %v514, %v512
    %v529 = vpack.c.b16 %v515, %v513
    %v530 = vpack.c.b16 %v518, %v516
    %v531 = vpack.c.b16 %v519, %v517
    %v532 = vpack.c.b16 %v522, %v520
    %v533 = vpack.c.b16 %v523, %v521
    %v534 = vpack.c.b16 %v526, %v524
    %v535 = vpack.c.b16 %v527, %v525
    %v545 = vsel %vm297, %v495, 0
    %547 = vmatprep.subr.bf16.mxu0 0
    %548 = vmatpush1.bf16.msra.mxu0 0
    %549 = vmatprep.subr.bf16.mxu0 0
    %550 = vmatpush1.bf16.msra.mxu0 0
    %551 = vmatprep.subr.bf16.mxu0 0
    %552 = vmatpush1.bf16.msra.mxu0 0
    %553 = vmatprep.subr.bf16.mxu0 0
    %554 = vmatpush1.bf16.msra.mxu0 0
    %555 = vmatprep.subr.bf16.mxu0 %v535
    %556 = vmatpush1.bf16.msra.mxu0 %v534
    %557 = vmatprep.subr.bf16.mxu0 %v533
    %558 = vmatpush1.bf16.msra.mxu0 %v532
    %559 = vmatprep.subr.bf16.mxu0 %v531
    %560 = vmatpush1.bf16.msra.mxu0 %v530
    %561 = vmatprep.subr.bf16.mxu0 %v529
    %562 = vmatpush1.bf16.msra.mxu0 %v528
    %563 = vmatprep.subr.bf16.mxu0 0
    %564 = vmatpush2.bf16.msra.mxu0 0
    %565 = vmatprep.subr.bf16.mxu0 0
    %566 = vmatpush2.bf16.msra.mxu0 0
    %567 = vmatprep.subr.bf16.mxu0 0
    %568 = vmatpush2.bf16.msra.mxu0 0
    %569 = vmatprep.subr.bf16.mxu0 0
    %570 = vmatpush2.bf16.msra.mxu0 0
    %571 = vmatprep.subr.bf16.mxu0 0
    %572 = vmatpush2.bf16.msra.mxu0 0
    %573 = vmatprep.subr.bf16.mxu0 0
    %574 = vmatpush2.bf16.msra.mxu0 0
    %575 = vmatprep.subr.bf16.mxu0 0
    %576 = vmatpush2.bf16.msra.mxu0 0
    %577 = vmatprep.subr.bf16.mxu0 0
    %578 = vmatpush2.bf16.msra.mxu0 0
    %579 = vmatprep.mubr.bf16.mxu0 0
    %580 = vmatmul.mubr.bf16.gmra.mxu0 %v545
    %v581 = vpop.f32.mrf.mxu0
    %v582 = vadd.f32 0.0, %v581
    %v583 = vpop.f32.mrf.mxu0
    %v584 = vadd.f32 0.0, %v583
    %v585 = vpop.f32.mrf.mxu0
    %v586 = vpop.f32.mrf.mxu0
    %587 = vdwg.mxu0
    %v596 = vunpack.c.l.b16 %v487
    %v597 = vunpack.c.h.b16 %v487
    %v598 = vunpack.c.l.b16 %v488
    %v599 = vunpack.c.h.b16 %v488
    %v600 = vunpack.c.l.b16 %v489
    %v601 = vunpack.c.h.b16 %v489
    %v602 = vunpack.c.l.b16 %v490
    %v603 = vunpack.c.h.b16 %v490
    %v604 = vunpack.c.l.b16 %v491
    %v605 = vunpack.c.h.b16 %v491
    %v606 = vunpack.c.l.b16 %v492
    %v607 = vunpack.c.h.b16 %v492
    %v608 = vunpack.c.l.b16 %v493
    %v609 = vunpack.c.h.b16 %v493
    %v610 = vunpack.c.l.b16 %v494
    %v611 = vunpack.c.h.b16 %v494
    %v612 = vpack.c.b16 %v598, %v596
    %v613 = vpack.c.b16 %v599, %v597
    %v614 = vpack.c.b16 %v602, %v600
    %v615 = vpack.c.b16 %v603, %v601
    %v616 = vpack.c.b16 %v606, %v604
    %v617 = vpack.c.b16 %v607, %v605
    %v618 = vpack.c.b16 %v610, %v608
    %v619 = vpack.c.b16 %v611, %v609
    %v629 = vsel %vm297, %v486, 0
    %631 = vmatprep.subr.bf16.mxu0 0
    %632 = vmatpush1.bf16.msra.mxu0 0
    %633 = vmatprep.subr.bf16.mxu0 0
    %634 = vmatpush1.bf16.msra.mxu0 0
    %635 = vmatprep.subr.bf16.mxu0 0
    %636 = vmatpush1.bf16.msra.mxu0 0
    %637 = vmatprep.subr.bf16.mxu0 0
    %638 = vmatpush1.bf16.msra.mxu0 0
    %639 = vmatprep.subr.bf16.mxu0 %v619
    %640 = vmatpush1.bf16.msra.mxu0 %v618
    %641 = vmatprep.subr.bf16.mxu0 %v617
    %642 = vmatpush1.bf16.msra.mxu0 %v616
    %643 = vmatprep.subr.bf16.mxu0 %v615
    %644 = vmatpush1.bf16.msra.mxu0 %v614
    %645 = vmatprep.subr.bf16.mxu0 %v613
    %646 = vmatpush1.bf16.msra.mxu0 %v612
    %647 = vmatprep.subr.bf16.mxu0 0
    %648 = vmatpush2.bf16.msra.mxu0 0
    %649 = vmatprep.subr.bf16.mxu0 0
    %650 = vmatpush2.bf16.msra.mxu0 0
    %651 = vmatprep.subr.bf16.mxu0 0
    %652 = vmatpush2.bf16.msra.mxu0 0
    %653 = vmatprep.subr.bf16.mxu0 0
    %654 = vmatpush2.bf16.msra.mxu0 0
    %655 = vmatprep.subr.bf16.mxu0 0
    %656 = vmatpush2.bf16.msra.mxu0 0
    %657 = vmatprep.subr.bf16.mxu0 0
    %658 = vmatpush2.bf16.msra.mxu0 0
    %659 = vmatprep.subr.bf16.mxu0 0
    %660 = vmatpush2.bf16.msra.mxu0 0
    %661 = vmatprep.subr.bf16.mxu0 0
    %662 = vmatpush2.bf16.msra.mxu0 0
    %663 = vmatprep.mubr.bf16.mxu0 0
    %664 = vmatmul.mubr.bf16.gmra.mxu0 %v629
    %v665 = vpop.f32.mrf.mxu0
    %v666 = vadd.f32 %v582, %v665
    %v667 = vpop.f32.mrf.mxu0
    %v668 = vadd.f32 %v584, %v667
    %v669 = vpop.f32.mrf.mxu0
    %v670 = vpop.f32.mrf.mxu0
    %671 = vdwg.mxu0
    %v672 = vld [vmem:[%s10] ss:$8 sm:$0x3]
    %v674 = vlaneseq
    %v675 = vshrl.u32 %v674, 7
    %v676 = vsub.s32 0, %v675
    %v677 = vrot.slane %v672, %v676
    %v678 = vlaneseq
    %v679 = vshrl.u32 %v678, 7
    %v680 = vsub.s32 1, %v679
    %v681 = vrot.slane %v672, %v680
    %v684 = vadd.f32 %v666, %v677
    %v685 = vadd.f32 %v668, %v681
    %v686 = vxor.u32 %v684, 2147483648
    %v687 = vxor.u32 %v685, 2147483648
    %v688 = vmul.f32 %v686, 1.442695
    %v689 = vpow.pop %v688
    %v690 = vmul.f32 %v687, 1.442695
    %v691 = vpow.pop %v690
    %v692 = vadd.f32 %v689, 1.0
    %v693 = vadd.f32 %v691, 1.0
    %v694 = vrcp.pop %v692
    %v695 = vmul.f32 1.0, %v694
    %v696 = vrcp.pop %v693
    %v697 = vmul.f32 1.0, %v696
    %v698 = vmul.f32 %v684, %v695
    %v699 = vmul.f32 %v685, %v697
    %s700 = scalar_lea.vmem %s10, 1
    %v701 = vld [vmem:[%s700] ss:$8 sm:$0x3]
    %s702 = scalar_lea.vmem %s10, 2
    %v703 = vld [vmem:[%s702] ss:$8 sm:$0x3]
    %v704 = vadd.f32 %v698, %v699
    %705 = vadd.xlane.f32.xlu0 %v704
    %v706 = vpop.xlane.xlu0 %705
    %v707 = vmul.f32 %v698, %v698
    %v708 = vmul.f32 %v699, %v699
    %v709 = vadd.f32 %v707, %v708
    %710 = vadd.xlane.f32.xlu0 %v709
    %v711 = vpop.xlane.xlu0 %710
    %v712 = vmul.f32 %v706, 0.00390625
    %v713 = vmul.f32 %v711, 0.00390625
    %v714 = vmul.f32 %v712, %v712
    %v715 = vsub.f32 %v713, %v714
    %v716 = vmax.f32 %v715, 0.0
    %v717 = vsub.f32 %v698, %v712
    %v718 = vsub.f32 %v699, %v712
    %v719 = vadd.f32 %v716, 1e-05
    %v720 = vrsqrt.pop %v719
    %v721 = vmul.f32 %v717, %v720
    %v722 = vmul.f32 %v718, %v720
    %v724 = vlaneseq
    %v725 = vshrl.u32 %v724, 7
    %v726 = vsub.s32 0, %v725
    %v727 = vrot.slane %v701, %v726
    %v728 = vlaneseq
    %v729 = vshrl.u32 %v728, 7
    %v730 = vsub.s32 1, %v729
    %v731 = vrot.slane %v701, %v730
    %v734 = vmul.f32 %v721, %v727
    %v735 = vmul.f32 %v722, %v731
    %v737 = vlaneseq
    %v738 = vshrl.u32 %v737, 7
    %v739 = vsub.s32 0, %v738
    %v740 = vrot.slane %v703, %v739
    %v741 = vlaneseq
    %v742 = vshrl.u32 %v741, 7
    %v743 = vsub.s32 1, %v742
    %v744 = vrot.slane %v703, %v743
    %v747 = vadd.f32 %v734, %v740
    %v748 = vadd.f32 %v735, %v744
    %v749 = vpack.c.bf16 %v747, %v747
    %v750 = vpack.c.bf16 %v748, %v748
    %v751 = vld [vmem:[#allocation10] sm:$0xff]
    %v752 = vld [vmem:[#allocation10 + $0x8] sm:$0xff]
    %v753 = vld [vmem:[#allocation10 + $0x10] sm:$0xff]
    %v754 = vld [vmem:[#allocation10 + $0x18] sm:$0xff]
    %v755 = vld [vmem:[#allocation10 + $0x20] sm:$0xff]
    %v756 = vld [vmem:[#allocation10 + $0x28] sm:$0xff]
    %v757 = vld [vmem:[#allocation10 + $0x30] sm:$0xff]
    %v758 = vld [vmem:[#allocation10 + $0x38] sm:$0xff]
    %v759 = vld [vmem:[#allocation10 + $0x40] sm:$0xff]
    %v760 = vld [vmem:[#allocation10 + $0x48] sm:$0xff]
    %v761 = vld [vmem:[#allocation10 + $0x50] sm:$0xff]
    %v762 = vld [vmem:[#allocation10 + $0x58] sm:$0xff]
    %v763 = vld [vmem:[#allocation10 + $0x60] sm:$0xff]
    %v764 = vld [vmem:[#allocation10 + $0x68] sm:$0xff]
    %v765 = vld [vmem:[#allocation10 + $0x70] sm:$0xff]
    %v766 = vld [vmem:[#allocation10 + $0x78] sm:$0xff]
    %v767 = vld [vmem:[#allocation10 + $0x80] sm:$0xff]
    %v768 = vld [vmem:[#allocation10 + $0x88] sm:$0xff]
    %v769 = vld [vmem:[#allocation10 + $0x90] sm:$0xff]
    %v770 = vld [vmem:[#allocation10 + $0x98] sm:$0xff]
    %v771 = vld [vmem:[#allocation10 + $0xa0] sm:$0xff]
    %v772 = vld [vmem:[#allocation10 + $0xa8] sm:$0xff]
    %v773 = vld [vmem:[#allocation10 + $0xb0] sm:$0xff]
    %v774 = vld [vmem:[#allocation10 + $0xb8] sm:$0xff]
    %v775 = vld [vmem:[#allocation10 + $0xc0] sm:$0xff]
    %v776 = vld [vmem:[#allocation10 + $0xc8] sm:$0xff]
    %v777 = vld [vmem:[#allocation10 + $0xd0] sm:$0xff]
    %v778 = vld [vmem:[#allocation10 + $0xd8] sm:$0xff]
    %v779 = vld [vmem:[#allocation10 + $0xe0] sm:$0xff]
    %v780 = vld [vmem:[#allocation10 + $0xe8] sm:$0xff]
    %v781 = vld [vmem:[#allocation10 + $0xf0] sm:$0xff]
    %v782 = vld [vmem:[#allocation10 + $0xf8] sm:$0xff]
    %s783 = scalar_lea.vmem %s10, 3
    %v784 = vld [vmem:[%s783] ss:$8 sm:$0x3]
    %v786 = vlaneseq
    %v787 = vshrl.u32 %v786, 7
    %v788 = vsub.s32 0, %v787
    %v789 = vrot.slane %v784, %v788
    %v790 = vlaneseq
    %v791 = vshrl.u32 %v790, 7
    %v792 = vsub.s32 1, %v791
    %v793 = vrot.slane %v784, %v792
    %v828 = vunpack.c.l.b16 %v751
    %v829 = vunpack.c.h.b16 %v751
    %v830 = vunpack.c.l.b16 %v752
    %v831 = vunpack.c.h.b16 %v752
    %v832 = vunpack.c.l.b16 %v753
    %v833 = vunpack.c.h.b16 %v753
    %v834 = vunpack.c.l.b16 %v754
    %v835 = vunpack.c.h.b16 %v754
    %v836 = vunpack.c.l.b16 %v755
    %v837 = vunpack.c.h.b16 %v755
    %v838 = vunpack.c.l.b16 %v756
    %v839 = vunpack.c.h.b16 %v756
    %v840 = vunpack.c.l.b16 %v757
    %v841 = vunpack.c.h.b16 %v757
    %v842 = vunpack.c.l.b16 %v758
    %v843 = vunpack.c.h.b16 %v758
    %v844 = vunpack.c.l.b16 %v759
    %v845 = vunpack.c.h.b16 %v759
    %v846 = vunpack.c.l.b16 %v760
    %v847 = vunpack.c.h.b16 %v760
    %v848 = vunpack.c.l.b16 %v761
    %v849 = vunpack.c.h.b16 %v761
    %v850 = vunpack.c.l.b16 %v762
    %v851 = vunpack.c.h.b16 %v762
    %v852 = vunpack.c.l.b16 %v763
    %v853 = vunpack.c.h.b16 %v763
    %v854 = vunpack.c.l.b16 %v764
    %v855 = vunpack.c.h.b16 %v764
    %v856 = vunpack.c.l.b16 %v765
    %v857 = vunpack.c.h.b16 %v765
    %v858 = vunpack.c.l.b16 %v766
    %v859 = vunpack.c.h.b16 %v766
    %v860 = vunpack.c.l.b16 %v767
    %v861 = vunpack.c.h.b16 %v767
    %v862 = vunpack.c.l.b16 %v768
    %v863 = vunpack.c.h.b16 %v768
    %v864 = vunpack.c.l.b16 %v769
    %v865 = vunpack.c.h.b16 %v769
    %v866 = vunpack.c.l.b16 %v770
    %v867 = vunpack.c.h.b16 %v770
    %v868 = vunpack.c.l.b16 %v771
    %v869 = vunpack.c.h.b16 %v771
    %v870 = vunpack.c.l.b16 %v772
    %v871 = vunpack.c.h.b16 %v772
    %v872 = vunpack.c.l.b16 %v773
    %v873 = vunpack.c.h.b16 %v773
    %v874 = vunpack.c.l.b16 %v774
    %v875 = vunpack.c.h.b16 %v774
    %v876 = vunpack.c.l.b16 %v775
    %v877 = vunpack.c.h.b16 %v775
    %v878 = vunpack.c.l.b16 %v776
    %v879 = vunpack.c.h.b16 %v776
    %v880 = vunpack.c.l.b16 %v777
    %v881 = vunpack.c.h.b16 %v777
    %v882 = vunpack.c.l.b16 %v778
    %v883 = vunpack.c.h.b16 %v778
    %v884 = vunpack.c.l.b16 %v779
    %v885 = vunpack.c.h.b16 %v779
    %v886 = vunpack.c.l.b16 %v780
    %v887 = vunpack.c.h.b16 %v780
    %v888 = vunpack.c.l.b16 %v781
    %v889 = vunpack.c.h.b16 %v781
    %v890 = vunpack.c.l.b16 %v782
    %v891 = vunpack.c.h.b16 %v782
    %v892 = vpack.c.b16 %v830, %v828
    %v893 = vpack.c.b16 %v831, %v829
    %v894 = vpack.c.b16 %v834, %v832
    %v895 = vpack.c.b16 %v835, %v833
    %v896 = vpack.c.b16 %v838, %v836
    %v897 = vpack.c.b16 %v839, %v837
    %v898 = vpack.c.b16 %v842, %v840
    %v899 = vpack.c.b16 %v843, %v841
    %v900 = vpack.c.b16 %v846, %v844
    %v901 = vpack.c.b16 %v847, %v845
    %v902 = vpack.c.b16 %v850, %v848
    %v903 = vpack.c.b16 %v851, %v849
    %v904 = vpack.c.b16 %v854, %v852
    %v905 = vpack.c.b16 %v855, %v853
    %v906 = vpack.c.b16 %v858, %v856
    %v907 = vpack.c.b16 %v859, %v857
    %v908 = vpack.c.b16 %v862, %v860
    %v909 = vpack.c.b16 %v863, %v861
    %v910 = vpack.c.b16 %v866, %v864
    %v911 = vpack.c.b16 %v867, %v865
    %v912 = vpack.c.b16 %v870, %v868
    %v913 = vpack.c.b16 %v871, %v869
    %v914 = vpack.c.b16 %v874, %v872
    %v915 = vpack.c.b16 %v875, %v873
    %v916 = vpack.c.b16 %v878, %v876
    %v917 = vpack.c.b16 %v879, %v877
    %v918 = vpack.c.b16 %v882, %v880
    %v919 = vpack.c.b16 %v883, %v881
    %v920 = vpack.c.b16 %v886, %v884
    %v921 = vpack.c.b16 %v887, %v885
    %v922 = vpack.c.b16 %v890, %v888
    %v923 = vpack.c.b16 %v891, %v889
    %956 = vmatprep.subr.bf16.mxu0 %v907
    %957 = vmatpush1.bf16.msra.mxu0 %v906
    %958 = vmatprep.subr.bf16.mxu0 %v905
    %959 = vmatpush1.bf16.msra.mxu0 %v904
    %960 = vmatprep.subr.bf16.mxu0 %v903
    %961 = vmatpush1.bf16.msra.mxu0 %v902
    %962 = vmatprep.subr.bf16.mxu0 %v901
    %963 = vmatpush1.bf16.msra.mxu0 %v900
    %964 = vmatprep.subr.bf16.mxu0 %v899
    %965 = vmatpush1.bf16.msra.mxu0 %v898
    %966 = vmatprep.subr.bf16.mxu0 %v897
    %967 = vmatpush1.bf16.msra.mxu0 %v896
    %968 = vmatprep.subr.bf16.mxu0 %v895
    %969 = vmatpush1.bf16.msra.mxu0 %v894
    %970 = vmatprep.subr.bf16.mxu0 %v893
    %971 = vmatpush1.bf16.msra.mxu0 %v892
    %972 = vmatprep.subr.bf16.mxu0 %v923
    %973 = vmatpush2.bf16.msra.mxu0 %v922
    %974 = vmatprep.subr.bf16.mxu0 %v921
    %975 = vmatpush2.bf16.msra.mxu0 %v920
    %976 = vmatprep.subr.bf16.mxu0 %v919
    %977 = vmatpush2.bf16.msra.mxu0 %v918
    %978 = vmatprep.subr.bf16.mxu0 %v917
    %979 = vmatpush2.bf16.msra.mxu0 %v916
    %980 = vmatprep.subr.bf16.mxu0 %v915
    %981 = vmatpush2.bf16.msra.mxu0 %v914
    %982 = vmatprep.subr.bf16.mxu0 %v913
    %983 = vmatpush2.bf16.msra.mxu0 %v912
    %984 = vmatprep.subr.bf16.mxu0 %v911
    %985 = vmatpush2.bf16.msra.mxu0 %v910
    %986 = vmatprep.subr.bf16.mxu0 %v909
    %987 = vmatpush2.bf16.msra.mxu0 %v908
    %988 = vmatprep.mubr.bf16.mxu0 %v750
    %989 = vmatmul.mubr.bf16.gmra.mxu0 %v749
    %v990 = vpop.f32.mrf.mxu0
    %v991 = vadd.f32 %v789, %v990
    %v992 = vpop.f32.mrf.mxu0
    %v993 = vadd.f32 %v793, %v992
    %v994 = vpop.f32.mrf.mxu0
    %v995 = vpop.f32.mrf.mxu0
    %996 = vdwg.mxu0
    %v997 = vxor.u32 %v991, 2147483648
    %v998 = vxor.u32 %v993, 2147483648
    %v999 = vmul.f32 %v997, 1.442695
    %v1000 = vpow.pop %v999
    %v1001 = vmul.f32 %v998, 1.442695
    %v1002 = vpow.pop %v1001
    %v1003 = vadd.f32 %v1000, 1.0
    %v1004 = vadd.f32 %v1002, 1.0
    %v1005 = vrcp.pop %v1003
    %v1006 = vmul.f32 1.0, %v1005
    %v1007 = vrcp.pop %v1004
    %v1008 = vmul.f32 1.0, %v1007
    %v1009 = vmul.f32 %v991, %v1006
    %v1010 = vmul.f32 %v993, %v1008
    %s1011 = scalar_lea.vmem %s10, 4
    %v1012 = vld [vmem:[%s1011] ss:$8 sm:$0x3]
    %s1013 = scalar_lea.vmem %s10, 5
    %v1014 = vld [vmem:[%s1013] ss:$8 sm:$0x3]
    %v1015 = vadd.f32 %v1009, %v1010
    %1016 = vadd.xlane.f32.xlu0 %v1015
    %v1017 = vpop.xlane.xlu0 %1016
    %v1018 = vmul.f32 %v1009, %v1009
    %v1019 = vmul.f32 %v1010, %v1010
    %v1020 = vadd.f32 %v1018, %v1019
    %1021 = vadd.xlane.f32.xlu0 %v1020
    %v1022 = vpop.xlane.xlu0 %1021
    %v1023 = vmul.f32 %v1017, 0.00390625
    %v1024 = vmul.f32 %v1022, 0.00390625
    %v1025 = vmul.f32 %v1023, %v1023
    %v1026 = vsub.f32 %v1024, %v1025
    %v1027 = vmax.f32 %v1026, 0.0
    %v1028 = vsub.f32 %v1009, %v1023
    %v1029 = vsub.f32 %v1010, %v1023
    %v1030 = vadd.f32 %v1027, 1e-05
    %v1031 = vrsqrt.pop %v1030
    %v1032 = vmul.f32 %v1028, %v1031
    %v1033 = vmul.f32 %v1029, %v1031
    %v1035 = vlaneseq
    %v1036 = vshrl.u32 %v1035, 7
    %v1037 = vsub.s32 0, %v1036
    %v1038 = vrot.slane %v1012, %v1037
    %v1039 = vlaneseq
    %v1040 = vshrl.u32 %v1039, 7
    %v1041 = vsub.s32 1, %v1040
    %v1042 = vrot.slane %v1012, %v1041
    %v1045 = vmul.f32 %v1032, %v1038
    %v1046 = vmul.f32 %v1033, %v1042
    %v1048 = vlaneseq
    %v1049 = vshrl.u32 %v1048, 7
    %v1050 = vsub.s32 0, %v1049
    %v1051 = vrot.slane %v1014, %v1050
    %v1052 = vlaneseq
    %v1053 = vshrl.u32 %v1052, 7
    %v1054 = vsub.s32 1, %v1053
    %v1055 = vrot.slane %v1014, %v1054
    %v1058 = vadd.f32 %v1045, %v1051
    %v1059 = vadd.f32 %v1046, %v1055
    %v1060 = vpack.c.bf16 %v1058, %v1058
    %v1061 = vpack.c.bf16 %v1059, %v1059
    %v1062 = vld [vmem:[#allocation11] sm:$0xf]
    %v1063 = vld [vmem:[#allocation11 + $0x4] sm:$0xf]
    %v1064 = vld [vmem:[#allocation11 + $0x8] sm:$0xf]
    %v1065 = vld [vmem:[#allocation11 + $0xc] sm:$0xf]
    %v1066 = vld [vmem:[#allocation11 + $0x10] sm:$0xf]
    %v1067 = vld [vmem:[#allocation11 + $0x14] sm:$0xf]
    %v1068 = vld [vmem:[#allocation11 + $0x18] sm:$0xf]
    %v1069 = vld [vmem:[#allocation11 + $0x1c] sm:$0xf]
    %v1070 = vld [vmem:[#allocation11 + $0x20] sm:$0xf]
    %v1071 = vld [vmem:[#allocation11 + $0x24] sm:$0xf]
    %v1072 = vld [vmem:[#allocation11 + $0x28] sm:$0xf]
    %v1073 = vld [vmem:[#allocation11 + $0x2c] sm:$0xf]
    %v1074 = vld [vmem:[#allocation11 + $0x30] sm:$0xf]
    %v1075 = vld [vmem:[#allocation11 + $0x34] sm:$0xf]
    %v1076 = vld [vmem:[#allocation11 + $0x38] sm:$0xf]
    %v1077 = vld [vmem:[#allocation11 + $0x3c] sm:$0xf]
    %v1078 = vld [vmem:[#allocation11 + $0x40] sm:$0xf]
    %v1079 = vld [vmem:[#allocation11 + $0x44] sm:$0xf]
    %v1080 = vld [vmem:[#allocation11 + $0x48] sm:$0xf]
    %v1081 = vld [vmem:[#allocation11 + $0x4c] sm:$0xf]
    %v1082 = vld [vmem:[#allocation11 + $0x50] sm:$0xf]
    %v1083 = vld [vmem:[#allocation11 + $0x54] sm:$0xf]
    %v1084 = vld [vmem:[#allocation11 + $0x58] sm:$0xf]
    %v1085 = vld [vmem:[#allocation11 + $0x5c] sm:$0xf]
    %v1086 = vld [vmem:[#allocation11 + $0x60] sm:$0xf]
    %v1087 = vld [vmem:[#allocation11 + $0x64] sm:$0xf]
    %v1088 = vld [vmem:[#allocation11 + $0x68] sm:$0xf]
    %v1089 = vld [vmem:[#allocation11 + $0x6c] sm:$0xf]
    %v1090 = vld [vmem:[#allocation11 + $0x70] sm:$0xf]
    %v1091 = vld [vmem:[#allocation11 + $0x74] sm:$0xf]
    %v1092 = vld [vmem:[#allocation11 + $0x78] sm:$0xf]
    %v1093 = vld [vmem:[#allocation11 + $0x7c] sm:$0xf]
    %v1094 = vld [vmem:[%s11] sm:$0x1]
    %v1096 = vlaneseq
    %v1097 = vshrl.u32 %v1096, 7
    %v1098 = vsub.s32 0, %v1097
    %v1099 = vrot.slane %v1094, %v1098
    %v1133 = vunpack.c.l.b16 %v1062
    %v1134 = vunpack.c.l.b16 %v1063
    %v1135 = vunpack.c.l.b16 %v1064
    %v1136 = vunpack.c.l.b16 %v1065
    %v1137 = vunpack.c.l.b16 %v1066
    %v1138 = vunpack.c.l.b16 %v1067
    %v1139 = vunpack.c.l.b16 %v1068
    %v1140 = vunpack.c.l.b16 %v1069
    %v1141 = vunpack.c.l.b16 %v1070
    %v1142 = vunpack.c.l.b16 %v1071
    %v1143 = vunpack.c.l.b16 %v1072
    %v1144 = vunpack.c.l.b16 %v1073
    %v1145 = vunpack.c.l.b16 %v1074
    %v1146 = vunpack.c.l.b16 %v1075
    %v1147 = vunpack.c.l.b16 %v1076
    %v1148 = vunpack.c.l.b16 %v1077
    %v1149 = vunpack.c.l.b16 %v1078
    %v1150 = vunpack.c.l.b16 %v1079
    %v1151 = vunpack.c.l.b16 %v1080
    %v1152 = vunpack.c.l.b16 %v1081
    %v1153 = vunpack.c.l.b16 %v1082
    %v1154 = vunpack.c.l.b16 %v1083
    %v1155 = vunpack.c.l.b16 %v1084
    %v1156 = vunpack.c.l.b16 %v1085
    %v1157 = vunpack.c.l.b16 %v1086
    %v1158 = vunpack.c.l.b16 %v1087
    %v1159 = vunpack.c.l.b16 %v1088
    %v1160 = vunpack.c.l.b16 %v1089
    %v1161 = vunpack.c.l.b16 %v1090
    %v1162 = vunpack.c.l.b16 %v1091
    %v1163 = vunpack.c.l.b16 %v1092
    %v1164 = vunpack.c.l.b16 %v1093
    %v1165 = vpack.c.b16 %v1134, %v1133
    %v1166 = vpack.c.b16 %v1136, %v1135
    %v1167 = vpack.c.b16 %v1138, %v1137
    %v1168 = vpack.c.b16 %v1140, %v1139
    %v1169 = vpack.c.b16 %v1142, %v1141
    %v1170 = vpack.c.b16 %v1144, %v1143
    %v1171 = vpack.c.b16 %v1146, %v1145
    %v1172 = vpack.c.b16 %v1148, %v1147
    %v1173 = vpack.c.b16 %v1150, %v1149
    %v1174 = vpack.c.b16 %v1152, %v1151
    %v1175 = vpack.c.b16 %v1154, %v1153
    %v1176 = vpack.c.b16 %v1156, %v1155
    %v1177 = vpack.c.b16 %v1158, %v1157
    %v1178 = vpack.c.b16 %v1160, %v1159
    %v1179 = vpack.c.b16 %v1162, %v1161
    %v1180 = vpack.c.b16 %v1164, %v1163
    %1197 = vmatprep.subr.bf16.mxu0 0
    %1198 = vmatpush1.bf16.msra.mxu0 %v1172
    %1199 = vmatprep.subr.bf16.mxu0 0
    %1200 = vmatpush1.bf16.msra.mxu0 %v1171
    %1201 = vmatprep.subr.bf16.mxu0 0
    %1202 = vmatpush1.bf16.msra.mxu0 %v1170
    %1203 = vmatprep.subr.bf16.mxu0 0
    %1204 = vmatpush1.bf16.msra.mxu0 %v1169
    %1205 = vmatprep.subr.bf16.mxu0 0
    %1206 = vmatpush1.bf16.msra.mxu0 %v1168
    %1207 = vmatprep.subr.bf16.mxu0 0
    %1208 = vmatpush1.bf16.msra.mxu0 %v1167
    %1209 = vmatprep.subr.bf16.mxu0 0
    %1210 = vmatpush1.bf16.msra.mxu0 %v1166
    %1211 = vmatprep.subr.bf16.mxu0 0
    %1212 = vmatpush1.bf16.msra.mxu0 %v1165
    %1213 = vmatprep.subr.bf16.mxu0 0
    %1214 = vmatpush2.bf16.msra.mxu0 %v1180
    %1215 = vmatprep.subr.bf16.mxu0 0
    %1216 = vmatpush2.bf16.msra.mxu0 %v1179
    %1217 = vmatprep.subr.bf16.mxu0 0
    %1218 = vmatpush2.bf16.msra.mxu0 %v1178
    %1219 = vmatprep.subr.bf16.mxu0 0
    %1220 = vmatpush2.bf16.msra.mxu0 %v1177
    %1221 = vmatprep.subr.bf16.mxu0 0
    %1222 = vmatpush2.bf16.msra.mxu0 %v1176
    %1223 = vmatprep.subr.bf16.mxu0 0
    %1224 = vmatpush2.bf16.msra.mxu0 %v1175
    %1225 = vmatprep.subr.bf16.mxu0 0
    %1226 = vmatpush2.bf16.msra.mxu0 %v1174
    %1227 = vmatprep.subr.bf16.mxu0 0
    %1228 = vmatpush2.bf16.msra.mxu0 %v1173
    %1229 = vmatprep.mubr.bf16.mxu0 %v1061
    %1230 = vmatmul.mubr.bf16.gmra.mxu0 %v1060
    %v1231 = vpop.f32.mrf.mxu0
    %v1232 = vadd.f32 %v1099, %v1231
    %v1233 = vpop.f32.mrf.mxu0
    %v1234 = vpop.f32.mrf.mxu0
    %v1235 = vpop.f32.mrf.mxu0
    %1236 = vdwg.mxu0
    %1237 = vst [vmem:[#allocation14] sm:$0xff] %v1232
    // Predicated region
    $region78: #{tpu_custom_call.1} parent=1 // pred_check
      _
    $region79: #{tpu_custom_call.1} parent=1 // pred_check_branch
      %1239 = sbr.rel (0) target = $region81
    $region80: #{tpu_custom_call.1} parent=1 // pred_region
      %s1241 = ssub.s32 128, 128
      %1242 = vsyncadd [#allocation4], %s1241
      %s1244 = sshll.u32 [#allocation14], 4
      %s1245 = int_to_ptr.vmem [resolvable:$true] %s1244
      %1247 = dma.vmem_to_hbm [thread:$0]  %s1245, 128, %s12, [#allocation4]
    $region81: #{tpu_custom_call.1} parent=1 // pred_fallthru
      _
    // Predicated region
    $region82: #{tpu_custom_call.1} parent=1 // pred_check
      _
    $region83: #{tpu_custom_call.1} parent=1 // pred_check_branch
      %1249 = sbr.rel (0) target = $region85
    $region84: #{tpu_custom_call.1} parent=1 // pred_region
      %1250 = dma.done [#allocation4], 128
    $region85: #{tpu_custom_call.1} parent=1 // pred_fallthru
      _
    %1251 = vsyncpa [#allocation3], 1
    %1252 = vsyncpa [#allocation6], 1
    %1253 = vsyncpa [#allocation9], 1
    %1254 = vsyncpa [#allocation12], 1
    %1255 = vsyncpa [#allocation4], 1

</llo_original>
